<compile_context>
chip_gen: v5e
topology: v5e:2x2
jax: 0.10.0
libtpu: 0.0.40
codegen_flags: <defaults>
</compile_context>

<pallas_src>
import jax
import jax.numpy as jnp
from jax import lax
from jax.experimental import pallas as pl
from jax.experimental.pallas import tpu as pltpu


def _round_up(x, m):
    return ((x + m - 1) // m) * m


# ----------------------------------------------------------------------------
# Pallas kernel: fused fwd+bwd GRU recurrence over one chunk of Tc time steps.
# ----------------------------------------------------------------------------
def _bidir_gru_kernel(gi_ref, whh_ref, bhh_ref, out_ref, h_ref):
    # gi_ref : (Tc, Bp, 6*Hp) precomputed x@W_ih + b_ih, gate-grouped
    #          [r_f | r_b | z_f | z_b | n_f | n_b]; the backward direction's
    #          rows are already time-reversed, so recurrence step i serves both.
    # whh_ref: (2*Hp, 6*Hp) block-diagonal recurrent weights (same grouping).
    # bhh_ref: (1, 6*Hp)    recurrent bias (same grouping).
    # out_ref: (Tc, Bp, 2*Hp) hidden states [h_f | h_b] per recurrence step.
    # h_ref  : VMEM scratch (Bp, 2*Hp) carrying hidden state across chunks.
    tc = gi_ref.shape[0]
    h2 = out_ref.shape[-1]               # 2*Hp (both directions side by side)

    @pl.when(pl.program_id(0) == 0)
    def _():
        h_ref[...] = jnp.zeros_like(h_ref)

    whh = whh_ref[...]
    bhh = bhh_ref[...]

    def step(i, h):
        # Single MXU matmul covers both directions (block-diagonal weights).
        gh = jnp.dot(h, whh, preferred_element_type=jnp.float32) + bhh
        gi = gi_ref[i]
        # PyTorch GRU gate math (gate order r, z, n), both directions at once.
        r = jax.nn.sigmoid(gi[:, 0:h2] + gh[:, 0:h2])
        z = jax.nn.sigmoid(gi[:, h2:2 * h2] + gh[:, h2:2 * h2])
        n = jnp.tanh(gi[:, 2 * h2:3 * h2] + r * gh[:, 2 * h2:3 * h2])
        h_new = (1.0 - z) * n + z * h
        out_ref[i] = h_new.astype(out_ref.dtype)
        return h_new

    h_ref[...] = lax.fori_loop(0, tc, step, h_ref[...], unroll=True)


def _bidir_gru_layer(x_tbd, lp, hp, *, time_block=32):
    """Run one bidirectional GRU layer (both directions in one pallas_call).

    x_tbd: (T, Bp, D) f32 time-major, batch already padded to a multiple of 8.
    lp:    packed layer params (see _pack_gru_params).
    Returns (out_f, out_b), each (T, Bp, Hp), in original time order.
    """
    T, Bp, _ = x_tbd.shape
    Tc = min(T, time_block)
    Tp = _round_up(T, Tc)
    num_chunks = Tp // Tc

    # Hoisted input projections: one big matmul per direction, not on the
    # serial recurrence path. Per-direction gate layout: [r | z | n], each Hp.
    gi_f = jnp.einsum("tbd,dg->tbg", x_tbd, lp["w_ih_f"]) + lp["b_ih_f"]
    gi_b = jnp.einsum("tbd,dg->tbg", x_tbd, lp["w_ih_b"]) + lp["b_ih_b"]
    gi_b = gi_b[::-1]                     # backward direction runs reversed time

    # Interleave gates so fwd/bwd share contiguous 2*Hp lane blocks.
    gi = jnp.concatenate(
        [gi_f[..., 0 * hp:1 * hp], gi_b[..., 0 * hp:1 * hp],
         gi_f[..., 1 * hp:2 * hp], gi_b[..., 1 * hp:2 * hp],
         gi_f[..., 2 * hp:3 * hp], gi_b[..., 2 * hp:3 * hp]], axis=-1)
    if Tp != T:
        gi = jnp.pad(gi, ((0, Tp - T), (0, 0), (0, 0)))

    out = pl.pallas_call(
        _bidir_gru_kernel,
        out_shape=jax.ShapeDtypeStruct((Tp, Bp, 2 * hp), jnp.float32),
        grid_spec=pltpu.PrefetchScalarGridSpec(
            num_scalar_prefetch=0,
            grid=(num_chunks,),
            in_specs=[
                pl.BlockSpec((Tc, Bp, 6 * hp), lambda c: (c, 0, 0)),
                pl.BlockSpec((2 * hp, 6 * hp), lambda c: (0, 0)),
                pl.BlockSpec((1, 6 * hp), lambda c: (0, 0)),
            ],
            out_specs=pl.BlockSpec((Tc, Bp, 2 * hp), lambda c: (c, 0, 0)),
            scratch_shapes=[pltpu.VMEM((Bp, 2 * hp), jnp.float32)],
        ),
        compiler_params=pltpu.CompilerParams(
            dimension_semantics=("arbitrary",),
            vmem_limit_bytes=32 * 1024 * 1024,
        ),
    )(gi, lp["w_hh"], lp["b_hh"])

    out = out[:T]
    out_f = out[:, :, :hp]                # forward direction, time-ascending
    out_b = out[::-1, :, hp:]             # backward direction, back to input order
    return out_f, out_b


# ----------------------------------------------------------------------------
# Weight packing: PyTorch-shaped GRU weights -> fused-kernel layout.
# ----------------------------------------------------------------------------
def _pack_gru_params(params, embedding_size, hidden_size, hp):
    """Per layer:
      w_ih_f / w_ih_b : (D_in, 3*Hp)  columns [r | z | n], zero-padded to Hp
      b_ih_f / b_ih_b : (3*Hp,)
      w_hh            : (2*Hp, 6*Hp)  block-diagonal, cols [r_f|r_b|z_f|z_b|n_f|n_b]
      b_hh            : (1, 6*Hp)
    Padded rows/cols are zero, so padded hidden lanes stay exactly 0.
    """
    H = hidden_size
    packed = []
    for layer in range(2):
        d_in = embedding_size if layer == 0 else 2 * H
        pf = params["gru"][(layer, 0)]
        pb = params["gru"][(layer, 1)]

        def pack_ih(p):
            w = jnp.zeros((d_in, 3 * hp), jnp.float32)
            b = jnp.zeros((3 * hp,), jnp.float32)
            for g in range(3):
                w = w.at[:, g * hp:g * hp + H].set(p["w_ih"][g * H:(g + 1) * H, :].T)
                b = b.at[g * hp:g * hp + H].set(p["b_ih"][g * H:(g + 1) * H])
            return w, b

        w_ih_f, b_ih_f = pack_ih(pf)
        w_ih_b, b_ih_b = pack_ih(pb)

        w_hh = jnp.zeros((2 * hp, 6 * hp), jnp.float32)
        b_hh = jnp.zeros((6 * hp,), jnp.float32)
        for g in range(3):
            cf = (2 * g) * hp          # column offset, forward gate block
            cb = (2 * g + 1) * hp      # column offset, backward gate block
            w_hh = w_hh.at[0:H, cf:cf + H].set(pf["w_hh"][g * H:(g + 1) * H, :].T)
            w_hh = w_hh.at[hp:hp + H, cb:cb + H].set(pb["w_hh"][g * H:(g + 1) * H, :].T)
            b_hh = b_hh.at[cf:cf + H].set(pf["b_hh"][g * H:(g + 1) * H])
            b_hh = b_hh.at[cb:cb + H].set(pb["b_hh"][g * H:(g + 1) * H])

        packed.append({
            "w_ih_f": w_ih_f, "b_ih_f": b_ih_f,
            "w_ih_b": w_ih_b, "b_ih_b": b_ih_b,
            "w_hh": w_hh, "b_hh": b_hh.reshape(1, -1),
        })
    return packed


# ----------------------------------------------------------------------------
# Full EncoderRNN forward (embedding gather + projections in plain JAX,
# recurrence in Pallas).
# ----------------------------------------------------------------------------
def encoder_rnn_forward(params, tokens, hidden_size, *, time_block=32):
    B, T = tokens.shape
    H = hidden_size
    E = params["embedding"].shape[1]
    Hp = _round_up(H, 64)     # 2*Hp multiple of 128 -> lane-dense output stores
    Bp = _round_up(B, 8)      # f32 sublane tile

    # NOTE: in a real model, pack once at init time rather than per forward.
    packed = _pack_gru_params(params, E, H, Hp)

    emb = jnp.take(params["embedding"], tokens, axis=0)          # (B, T, E)
    x = jnp.transpose(emb, (1, 0, 2)).astype(jnp.float32)        # (T, B, E)
    x = jnp.pad(x, ((0, 0), (0, Bp - B), (0, 0)))                # (T, Bp, E)

    hiddens = []
    layer_in = x
    for layer in range(2):
        out_f, out_b = _bidir_gru_layer(layer_in, packed[layer], Hp,
                                        time_block=time_block)
        hiddens.append(out_f[T - 1, :B, :H])   # final fwd state (time T-1)
        hiddens.append(out_b[0, :B, :H])       # final bwd state (time 0)
        layer_in = jnp.concatenate([out_f[..., :H], out_b[..., :H]], axis=-1)

    output = jnp.transpose(layer_in, (1, 0, 2))[:B]              # (B, T, 2H)
    hidden = jnp.stack(hiddens, axis=0)                          # (4, B, H)
    return output, hidden


# ----------------------------------------------------------------------------
# Pure-JAX reference (for correctness check only).
# ----------------------------------------------------------------------------
def _gru_direction_ref(x_tbd, p, reverse):
    H = p["w_hh"].shape[1]
    w_ih_t, w_hh_t = p["w_ih"].T, p["w_hh"].T
    b_ih, b_hh = p["b_ih"], p["b_hh"]
    xs = x_tbd[::-1] if reverse else x_tbd

    def step(h, x):
        gi = x @ w_ih_t + b_ih
        gh = h @ w_hh_t + b_hh
        i_r, i_z, i_n = gi[:, :H], gi[:, H:2 * H], gi[:, 2 * H:]
        h_r, h_z, h_n = gh[:, :H], gh[:, H:2 * H], gh[:, 2 * H:]
        r = jax.nn.sigmoid(i_r + h_r)
        z = jax.nn.sigmoid(i_z + h_z)
        n = jnp.tanh(i_n + r * h_n)
        h_new = (1.0 - z) * n + z * h
        return h_new, h_new

    h0 = jnp.zeros((x_tbd.shape[1], H), jnp.float32)
    hn, outs = lax.scan(step, h0, xs)
    if reverse:
        outs = outs[::-1]
    return outs, hn


def encoder_rnn_ref(params, tokens):
    emb = jnp.take(params["embedding"], tokens, axis=0)
    x = jnp.transpose(emb, (1, 0, 2)).astype(jnp.float32)
    hiddens = []
    layer_in = x
    for layer in range(2):
        dir_outs = []
        for direction, rev in ((0, False), (1, True)):
            o, hn = _gru_direction_ref(layer_in, params["gru"][(layer, direction)], rev)
            dir_outs.append(o)
            hiddens.append(hn)
        layer_in = jnp.concatenate(dir_outs, axis=-1)
    return jnp.transpose(layer_in, (1, 0, 2)), jnp.stack(hiddens, axis=0)


# ----------------------------------------------------------------------------
# Deterministic parameter initialization (PyTorch nn.Embedding + nn.GRU shapes).
# ----------------------------------------------------------------------------
def init_params(key, input_size, embedding_size, hidden_size):
    H = hidden_size
    k_emb, key = jax.random.split(key)
    params = {
        "embedding": jax.random.normal(k_emb, (input_size, embedding_size),
                                       jnp.float32),
        "gru": {},
    }
    bound = 1.0 / jnp.sqrt(jnp.float32(H))
    for layer in range(2):
        d_in = embedding_size if layer == 0 else 2 * H
        for direction in range(2):
            key, k1, k2, k3, k4 = jax.random.split(key, 5)
            params["gru"][(layer, direction)] = {
                "w_ih": jax.random.uniform(k1, (3 * H, d_in), jnp.float32, -bound, bound),
                "w_hh": jax.random.uniform(k2, (3 * H, H), jnp.float32, -bound, bound),
                "b_ih": jax.random.uniform(k3, (3 * H,), jnp.float32, -bound, bound),
                "b_hh": jax.random.uniform(k4, (3 * H,), jnp.float32, -bound, bound),
            }
    return params


if __name__ == "__main__":
    VOCAB, EMB, HIDDEN = 20, 16, 32
    B, T = 2, 8

    key = jax.random.PRNGKey(0)
    k_par, k_tok = jax.random.split(key)
    params = init_params(k_par, VOCAB, EMB, HIDDEN)
    tokens = jax.random.randint(k_tok, (B, T), 0, VOCAB, dtype=jnp.int32)

    output, hidden = encoder_rnn_forward(params, tokens, HIDDEN)
    jax.block_until_ready((output, hidden))

    assert output.shape == (B, T, 2 * HIDDEN), output.shape
    assert hidden.shape == (4, B, HIDDEN), hidden.shape

    ref_out, ref_hid = encoder_rnn_ref(params, tokens)
    assert jnp.allclose(output, ref_out, rtol=1e-4, atol=1e-4), \
        float(jnp.max(jnp.abs(output - ref_out)))
    assert jnp.allclose(hidden, ref_hid, rtol=1e-4, atol=1e-4), \
        float(jnp.max(jnp.abs(hidden - ref_hid)))

    print("KERNEL_OK")
</pallas_src>

<mosaic_0001>
module attributes {stable_mosaic.version = 11 : i64} {
  func.func @_bidir_gru_kernel(%arg0: i32, %arg1: memref<8x8x384xf32, #tpu.memory_space<vmem>>, %arg2: memref<128x384xf32, #tpu.memory_space<vmem>>, %arg3: memref<1x384xf32, #tpu.memory_space<vmem>>, %arg4: memref<8x8x128xf32, #tpu.memory_space<vmem>>, %arg5: memref<8x128xf32, #tpu.memory_space<vmem>>) attributes {dimension_semantics = [#tpu.dimension_semantics<arbitrary>], iteration_bounds = array<i64: 1>, scalar_prefetch = 0 : i64, scratch_operands = 1 : i64, tpu.core_type = #tpu.core_type<tc>, window_params = [{transform_indices = @transform_0, window_bounds = array<i64: 8, 8, 384>}, {pipeline_mode = #tpu.pipeline_mode<synchronous>, transform_indices = @transform_1, window_bounds = array<i64: 128, 384>}, {pipeline_mode = #tpu.pipeline_mode<synchronous>, transform_indices = @transform_2, window_bounds = array<i64: 1, 384>}, {transform_indices = @transform_3, window_bounds = array<i64: 8, 8, 128>}]} {
    %c0_i32 = arith.constant 0 : i32
    %0 = arith.cmpi eq, %arg0, %c0_i32 : i32
    %1 = arith.extui %0 : i1 to i32
    %c0_i32_0 = arith.constant 0 : i32
    %2 = arith.cmpi ne, %1, %c0_i32_0 : i32
    scf.if %2 {
      %cst_72 = arith.constant 0.000000e+00 : f32
      %295 = vector.broadcast %cst_72 : f32 to vector<8x128xf32>
      %c0_73 = arith.constant 0 : index
      %c0_74 = arith.constant 0 : index
      %296 = vector.load %arg5[%c0_73, %c0_74] : memref<8x128xf32, #tpu.memory_space<vmem>>, vector<8x128xf32>
      tpu.vector_store %arg5[%c0_73, %c0_74], %295 {strides = array<i32>} : memref<8x128xf32, #tpu.memory_space<vmem>>, vector<8x128xf32>,
    } else {
    }
    %c0 = arith.constant 0 : index
    %c0_1 = arith.constant 0 : index
    %3 = vector.load %arg2[%c0, %c0_1] : memref<128x384xf32, #tpu.memory_space<vmem>>, vector<128x384xf32>
    %c0_2 = arith.constant 0 : index
    %c0_3 = arith.constant 0 : index
    %4 = vector.load %arg3[%c0_2, %c0_3] : memref<1x384xf32, #tpu.memory_space<vmem>>, vector<1x384xf32>
    %c0_4 = arith.constant 0 : index
    %c0_5 = arith.constant 0 : index
    %5 = vector.load %arg5[%c0_4, %c0_5] : memref<8x128xf32, #tpu.memory_space<vmem>>, vector<8x128xf32>
    %c0_i32_6 = arith.constant 0 : i32
    %cst = arith.constant dense<0.000000e+00> : vector<8x384xf32>
    %6 = tpu.matmul %5, %3, %cst {dimension_numbers = #tpu.dot_dimension_numbers<[1], [0], [0], [1], [0, 0, 1, 1], [], []>} : vector<8x128xf32>, vector<128x384xf32>, vector<8x384xf32> -> vector<8x384xf32>
    %7 = vector.broadcast %4 : vector<1x384xf32> to vector<8x384xf32>
    %8 = arith.addf %6, %7 : vector<8x384xf32>
    %9 = arith.index_cast %c0_i32_6 : i32 to index
    %c0_7 = arith.constant 0 : index
    %c0_8 = arith.constant 0 : index
    %10 = vector.load %arg1[%9, %c0_7, %c0_8] : memref<8x8x384xf32, #tpu.memory_space<vmem>>, vector<1x8x384xf32>
    %11 = vector.shape_cast %10 : vector<1x8x384xf32> to vector<8x384xf32>
    %12 = vector.extract_strided_slice %11 {offsets = [0, 0], sizes = [8, 128], strides = [1, 1]} : vector<8x384xf32> to vector<8x128xf32>
    %13 = vector.extract_strided_slice %8 {offsets = [0, 0], sizes = [8, 128], strides = [1, 1]} : vector<8x384xf32> to vector<8x128xf32>
    %14 = arith.addf %12, %13 : vector<8x128xf32>
    %15 = arith.negf %14 : vector<8x128xf32>
    %16 = math.exp %15 : vector<8x128xf32>
    %cst_9 = arith.constant 1.000000e+00 : f32
    %17 = vector.broadcast %cst_9 : f32 to vector<8x128xf32>
    %18 = arith.addf %17, %16 : vector<8x128xf32>
    %19 = arith.divf %17, %18 : vector<8x128xf32>
    %20 = vector.extract_strided_slice %11 {offsets = [0, 128], sizes = [8, 128], strides = [1, 1]} : vector<8x384xf32> to vector<8x128xf32>
    %21 = vector.extract_strided_slice %8 {offsets = [0, 128], sizes = [8, 128], strides = [1, 1]} : vector<8x384xf32> to vector<8x128xf32>
    %22 = arith.addf %20, %21 : vector<8x128xf32>
    %23 = arith.negf %22 : vector<8x128xf32>
    %24 = math.exp %23 : vector<8x128xf32>
    %cst_10 = arith.constant 1.000000e+00 : f32
    %25 = vector.broadcast %cst_10 : f32 to vector<8x128xf32>
    %26 = arith.addf %25, %24 : vector<8x128xf32>
    %27 = arith.divf %25, %26 : vector<8x128xf32>
    %28 = vector.extract_strided_slice %11 {offsets = [0, 256], sizes = [8, 128], strides = [1, 1]} : vector<8x384xf32> to vector<8x128xf32>
    %29 = vector.extract_strided_slice %8 {offsets = [0, 256], sizes = [8, 128], strides = [1, 1]} : vector<8x384xf32> to vector<8x128xf32>
    %30 = arith.mulf %19, %29 : vector<8x128xf32>
    %31 = arith.addf %28, %30 : vector<8x128xf32>
    %32 = math.tanh %31 : vector<8x128xf32>
    %cst_11 = arith.constant 1.000000e+00 : f32
    %33 = vector.broadcast %cst_11 : f32 to vector<8x128xf32>
    %34 = arith.subf %33, %27 : vector<8x128xf32>
    %35 = arith.mulf %34, %32 : vector<8x128xf32>
    %36 = arith.mulf %27, %5 : vector<8x128xf32>
    %37 = arith.addf %35, %36 : vector<8x128xf32>
    %38 = arith.index_cast %c0_i32_6 : i32 to index
    %c0_12 = arith.constant 0 : index
    %c0_13 = arith.constant 0 : index
    %39 = vector.load %arg4[%38, %c0_12, %c0_13] : memref<8x8x128xf32, #tpu.memory_space<vmem>>, vector<1x8x128xf32>
    %40 = vector.shape_cast %39 : vector<1x8x128xf32> to vector<8x128xf32>
    %41 = vector.shape_cast %37 : vector<8x128xf32> to vector<1x8x128xf32>
    tpu.vector_store %arg4[%38, %c0_12, %c0_13], %41 {strides = array<i32>} : memref<8x8x128xf32, #tpu.memory_space<vmem>>, vector<1x8x128xf32>,
    %c1_i32 = arith.constant 1 : i32
    %cst_14 = arith.constant dense<0.000000e+00> : vector<8x384xf32>
    %42 = tpu.matmul %37, %3, %cst_14 {dimension_numbers = #tpu.dot_dimension_numbers<[1], [0], [0], [1], [0, 0, 1, 1], [], []>} : vector<8x128xf32>, vector<128x384xf32>, vector<8x384xf32> -> vector<8x384xf32>
    %43 = vector.broadcast %4 : vector<1x384xf32> to vector<8x384xf32>
    %44 = arith.addf %42, %43 : vector<8x384xf32>
    %45 = arith.index_cast %c1_i32 : i32 to index
    %c0_15 = arith.constant 0 : index
    %c0_16 = arith.constant 0 : index
    %46 = vector.load %arg1[%45, %c0_15, %c0_16] : memref<8x8x384xf32, #tpu.memory_space<vmem>>, vector<1x8x384xf32>
    %47 = vector.shape_cast %46 : vector<1x8x384xf32> to vector<8x384xf32>
    %48 = vector.extract_strided_slice %47 {offsets = [0, 0], sizes = [8, 128], strides = [1, 1]} : vector<8x384xf32> to vector<8x128xf32>
    %49 = vector.extract_strided_slice %44 {offsets = [0, 0], sizes = [8, 128], strides = [1, 1]} : vector<8x384xf32> to vector<8x128xf32>
    %50 = arith.addf %48, %49 : vector<8x128xf32>
    %51 = arith.negf %50 : vector<8x128xf32>
    %52 = math.exp %51 : vector<8x128xf32>
    %cst_17 = arith.constant 1.000000e+00 : f32
    %53 = vector.broadcast %cst_17 : f32 to vector<8x128xf32>
    %54 = arith.addf %53, %52 : vector<8x128xf32>
    %55 = arith.divf %53, %54 : vector<8x128xf32>
    %56 = vector.extract_strided_slice %47 {offsets = [0, 128], sizes = [8, 128], strides = [1, 1]} : vector<8x384xf32> to vector<8x128xf32>
    %57 = vector.extract_strided_slice %44 {offsets = [0, 128], sizes = [8, 128], strides = [1, 1]} : vector<8x384xf32> to vector<8x128xf32>
    %58 = arith.addf %56, %57 : vector<8x128xf32>
    %59 = arith.negf %58 : vector<8x128xf32>
    %60 = math.exp %59 : vector<8x128xf32>
    %cst_18 = arith.constant 1.000000e+00 : f32
    %61 = vector.broadcast %cst_18 : f32 to vector<8x128xf32>
    %62 = arith.addf %61, %60 : vector<8x128xf32>
    %63 = arith.divf %61, %62 : vector<8x128xf32>
    %64 = vector.extract_strided_slice %47 {offsets = [0, 256], sizes = [8, 128], strides = [1, 1]} : vector<8x384xf32> to vector<8x128xf32>
    %65 = vector.extract_strided_slice %44 {offsets = [0, 256], sizes = [8, 128], strides = [1, 1]} : vector<8x384xf32> to vector<8x128xf32>
    %66 = arith.mulf %55, %65 : vector<8x128xf32>
    %67 = arith.addf %64, %66 : vector<8x128xf32>
    %68 = math.tanh %67 : vector<8x128xf32>
    %cst_19 = arith.constant 1.000000e+00 : f32
    %69 = vector.broadcast %cst_19 : f32 to vector<8x128xf32>
    %70 = arith.subf %69, %63 : vector<8x128xf32>
    %71 = arith.mulf %70, %68 : vector<8x128xf32>
    %72 = arith.mulf %63, %37 : vector<8x128xf32>
    %73 = arith.addf %71, %72 : vector<8x128xf32>
    %74 = arith.index_cast %c1_i32 : i32 to index
    %c0_20 = arith.constant 0 : index
    %c0_21 = arith.constant 0 : index
    %75 = vector.load %arg4[%74, %c0_20, %c0_21] : memref<8x8x128xf32, #tpu.memory_space<vmem>>, vector<1x8x128xf32>
    %76 = vector.shape_cast %75 : vector<1x8x128xf32> to vector<8x128xf32>
    %77 = vector.shape_cast %73 : vector<8x128xf32> to vector<1x8x128xf32>
    tpu.vector_store %arg4[%74, %c0_20, %c0_21], %77 {strides = array<i32>} : memref<8x8x128xf32, #tpu.memory_space<vmem>>, vector<1x8x128xf32>,
    %c2_i32 = arith.constant 2 : i32
    %cst_22 = arith.constant dense<0.000000e+00> : vector<8x384xf32>
    %78 = tpu.matmul %73, %3, %cst_22 {dimension_numbers = #tpu.dot_dimension_numbers<[1], [0], [0], [1], [0, 0, 1, 1], [], []>} : vector<8x128xf32>, vector<128x384xf32>, vector<8x384xf32> -> vector<8x384xf32>
    %79 = vector.broadcast %4 : vector<1x384xf32> to vector<8x384xf32>
    %80 = arith.addf %78, %79 : vector<8x384xf32>
    %81 = arith.index_cast %c2_i32 : i32 to index
    %c0_23 = arith.constant 0 : index
    %c0_24 = arith.constant 0 : index
    %82 = vector.load %arg1[%81, %c0_23, %c0_24] : memref<8x8x384xf32, #tpu.memory_space<vmem>>, vector<1x8x384xf32>
    %83 = vector.shape_cast %82 : vector<1x8x384xf32> to vector<8x384xf32>
    %84 = vector.extract_strided_slice %83 {offsets = [0, 0], sizes = [8, 128], strides = [1, 1]} : vector<8x384xf32> to vector<8x128xf32>
    %85 = vector.extract_strided_slice %80 {offsets = [0, 0], sizes = [8, 128], strides = [1, 1]} : vector<8x384xf32> to vector<8x128xf32>
    %86 = arith.addf %84, %85 : vector<8x128xf32>
    %87 = arith.negf %86 : vector<8x128xf32>
    %88 = math.exp %87 : vector<8x128xf32>
    %cst_25 = arith.constant 1.000000e+00 : f32
    %89 = vector.broadcast %cst_25 : f32 to vector<8x128xf32>
    %90 = arith.addf %89, %88 : vector<8x128xf32>
    %91 = arith.divf %89, %90 : vector<8x128xf32>
    %92 = vector.extract_strided_slice %83 {offsets = [0, 128], sizes = [8, 128], strides = [1, 1]} : vector<8x384xf32> to vector<8x128xf32>
    %93 = vector.extract_strided_slice %80 {offsets = [0, 128], sizes = [8, 128], strides = [1, 1]} : vector<8x384xf32> to vector<8x128xf32>
    %94 = arith.addf %92, %93 : vector<8x128xf32>
    %95 = arith.negf %94 : vector<8x128xf32>
    %96 = math.exp %95 : vector<8x128xf32>
    %cst_26 = arith.constant 1.000000e+00 : f32
    %97 = vector.broadcast %cst_26 : f32 to vector<8x128xf32>
    %98 = arith.addf %97, %96 : vector<8x128xf32>
    %99 = arith.divf %97, %98 : vector<8x128xf32>
    %100 = vector.extract_strided_slice %83 {offsets = [0, 256], sizes = [8, 128], strides = [1, 1]} : vector<8x384xf32> to vector<8x128xf32>
    %101 = vector.extract_strided_slice %80 {offsets = [0, 256], sizes = [8, 128], strides = [1, 1]} : vector<8x384xf32> to vector<8x128xf32>
    %102 = arith.mulf %91, %101 : vector<8x128xf32>
    %103 = arith.addf %100, %102 : vector<8x128xf32>
    %104 = math.tanh %103 : vector<8x128xf32>
    %cst_27 = arith.constant 1.000000e+00 : f32
    %105 = vector.broadcast %cst_27 : f32 to vector<8x128xf32>
    %106 = arith.subf %105, %99 : vector<8x128xf32>
    %107 = arith.mulf %106, %104 : vector<8x128xf32>
    %108 = arith.mulf %99, %73 : vector<8x128xf32>
    %109 = arith.addf %107, %108 : vector<8x128xf32>
    %110 = arith.index_cast %c2_i32 : i32 to index
    %c0_28 = arith.constant 0 : index
    %c0_29 = arith.constant 0 : index
    %111 = vector.load %arg4[%110, %c0_28, %c0_29] : memref<8x8x128xf32, #tpu.memory_space<vmem>>, vector<1x8x128xf32>
    %112 = vector.shape_cast %111 : vector<1x8x128xf32> to vector<8x128xf32>
    %113 = vector.shape_cast %109 : vector<8x128xf32> to vector<1x8x128xf32>
    tpu.vector_store %arg4[%110, %c0_28, %c0_29], %113 {strides = array<i32>} : memref<8x8x128xf32, #tpu.memory_space<vmem>>, vector<1x8x128xf32>,
    %c3_i32 = arith.constant 3 : i32
    %cst_30 = arith.constant dense<0.000000e+00> : vector<8x384xf32>
    %114 = tpu.matmul %109, %3, %cst_30 {dimension_numbers = #tpu.dot_dimension_numbers<[1], [0], [0], [1], [0, 0, 1, 1], [], []>} : vector<8x128xf32>, vector<128x384xf32>, vector<8x384xf32> -> vector<8x384xf32>
    %115 = vector.broadcast %4 : vector<1x384xf32> to vector<8x384xf32>
    %116 = arith.addf %114, %115 : vector<8x384xf32>
    %117 = arith.index_cast %c3_i32 : i32 to index
    %c0_31 = arith.constant 0 : index
    %c0_32 = arith.constant 0 : index
    %118 = vector.load %arg1[%117, %c0_31, %c0_32] : memref<8x8x384xf32, #tpu.memory_space<vmem>>, vector<1x8x384xf32>
    %119 = vector.shape_cast %118 : vector<1x8x384xf32> to vector<8x384xf32>
    %120 = vector.extract_strided_slice %119 {offsets = [0, 0], sizes = [8, 128], strides = [1, 1]} : vector<8x384xf32> to vector<8x128xf32>
    %121 = vector.extract_strided_slice %116 {offsets = [0, 0], sizes = [8, 128], strides = [1, 1]} : vector<8x384xf32> to vector<8x128xf32>
    %122 = arith.addf %120, %121 : vector<8x128xf32>
    %123 = arith.negf %122 : vector<8x128xf32>
    %124 = math.exp %123 : vector<8x128xf32>
    %cst_33 = arith.constant 1.000000e+00 : f32
    %125 = vector.broadcast %cst_33 : f32 to vector<8x128xf32>
    %126 = arith.addf %125, %124 : vector<8x128xf32>
    %127 = arith.divf %125, %126 : vector<8x128xf32>
    %128 = vector.extract_strided_slice %119 {offsets = [0, 128], sizes = [8, 128], strides = [1, 1]} : vector<8x384xf32> to vector<8x128xf32>
    %129 = vector.extract_strided_slice %116 {offsets = [0, 128], sizes = [8, 128], strides = [1, 1]} : vector<8x384xf32> to vector<8x128xf32>
    %130 = arith.addf %128, %129 : vector<8x128xf32>
    %131 = arith.negf %130 : vector<8x128xf32>
    %132 = math.exp %131 : vector<8x128xf32>
    %cst_34 = arith.constant 1.000000e+00 : f32
    %133 = vector.broadcast %cst_34 : f32 to vector<8x128xf32>
    %134 = arith.addf %133, %132 : vector<8x128xf32>
    %135 = arith.divf %133, %134 : vector<8x128xf32>
    %136 = vector.extract_strided_slice %119 {offsets = [0, 256], sizes = [8, 128], strides = [1, 1]} : vector<8x384xf32> to vector<8x128xf32>
    %137 = vector.extract_strided_slice %116 {offsets = [0, 256], sizes = [8, 128], strides = [1, 1]} : vector<8x384xf32> to vector<8x128xf32>
    %138 = arith.mulf %127, %137 : vector<8x128xf32>
    %139 = arith.addf %136, %138 : vector<8x128xf32>
    %140 = math.tanh %139 : vector<8x128xf32>
    %cst_35 = arith.constant 1.000000e+00 : f32
    %141 = vector.broadcast %cst_35 : f32 to vector<8x128xf32>
    %142 = arith.subf %141, %135 : vector<8x128xf32>
    %143 = arith.mulf %142, %140 : vector<8x128xf32>
    %144 = arith.mulf %135, %109 : vector<8x128xf32>
    %145 = arith.addf %143, %144 : vector<8x128xf32>
    %146 = arith.index_cast %c3_i32 : i32 to index
    %c0_36 = arith.constant 0 : index
    %c0_37 = arith.constant 0 : index
    %147 = vector.load %arg4[%146, %c0_36, %c0_37] : memref<8x8x128xf32, #tpu.memory_space<vmem>>, vector<1x8x128xf32>
    %148 = vector.shape_cast %147 : vector<1x8x128xf32> to vector<8x128xf32>
    %149 = vector.shape_cast %145 : vector<8x128xf32> to vector<1x8x128xf32>
    tpu.vector_store %arg4[%146, %c0_36, %c0_37], %149 {strides = array<i32>} : memref<8x8x128xf32, #tpu.memory_space<vmem>>, vector<1x8x128xf32>,
    %c4_i32 = arith.constant 4 : i32
    %cst_38 = arith.constant dense<0.000000e+00> : vector<8x384xf32>
    %150 = tpu.matmul %145, %3, %cst_38 {dimension_numbers = #tpu.dot_dimension_numbers<[1], [0], [0], [1], [0, 0, 1, 1], [], []>} : vector<8x128xf32>, vector<128x384xf32>, vector<8x384xf32> -> vector<8x384xf32>
    %151 = vector.broadcast %4 : vector<1x384xf32> to vector<8x384xf32>
    %152 = arith.addf %150, %151 : vector<8x384xf32>
    %153 = arith.index_cast %c4_i32 : i32 to index
    %c0_39 = arith.constant 0 : index
    %c0_40 = arith.constant 0 : index
    %154 = vector.load %arg1[%153, %c0_39, %c0_40] : memref<8x8x384xf32, #tpu.memory_space<vmem>>, vector<1x8x384xf32>
    %155 = vector.shape_cast %154 : vector<1x8x384xf32> to vector<8x384xf32>
    %156 = vector.extract_strided_slice %155 {offsets = [0, 0], sizes = [8, 128], strides = [1, 1]} : vector<8x384xf32> to vector<8x128xf32>
    %157 = vector.extract_strided_slice %152 {offsets = [0, 0], sizes = [8, 128], strides = [1, 1]} : vector<8x384xf32> to vector<8x128xf32>
    %158 = arith.addf %156, %157 : vector<8x128xf32>
    %159 = arith.negf %158 : vector<8x128xf32>
    %160 = math.exp %159 : vector<8x128xf32>
    %cst_41 = arith.constant 1.000000e+00 : f32
    %161 = vector.broadcast %cst_41 : f32 to vector<8x128xf32>
    %162 = arith.addf %161, %160 : vector<8x128xf32>
    %163 = arith.divf %161, %162 : vector<8x128xf32>
    %164 = vector.extract_strided_slice %155 {offsets = [0, 128], sizes = [8, 128], strides = [1, 1]} : vector<8x384xf32> to vector<8x128xf32>
    %165 = vector.extract_strided_slice %152 {offsets = [0, 128], sizes = [8, 128], strides = [1, 1]} : vector<8x384xf32> to vector<8x128xf32>
    %166 = arith.addf %164, %165 : vector<8x128xf32>
    %167 = arith.negf %166 : vector<8x128xf32>
    %168 = math.exp %167 : vector<8x128xf32>
    %cst_42 = arith.constant 1.000000e+00 : f32
    %169 = vector.broadcast %cst_42 : f32 to vector<8x128xf32>
    %170 = arith.addf %169, %168 : vector<8x128xf32>
    %171 = arith.divf %169, %170 : vector<8x128xf32>
    %172 = vector.extract_strided_slice %155 {offsets = [0, 256], sizes = [8, 128], strides = [1, 1]} : vector<8x384xf32> to vector<8x128xf32>
    %173 = vector.extract_strided_slice %152 {offsets = [0, 256], sizes = [8, 128], strides = [1, 1]} : vector<8x384xf32> to vector<8x128xf32>
    %174 = arith.mulf %163, %173 : vector<8x128xf32>
    %175 = arith.addf %172, %174 : vector<8x128xf32>
    %176 = math.tanh %175 : vector<8x128xf32>
    %cst_43 = arith.constant 1.000000e+00 : f32
    %177 = vector.broadcast %cst_43 : f32 to vector<8x128xf32>
    %178 = arith.subf %177, %171 : vector<8x128xf32>
    %179 = arith.mulf %178, %176 : vector<8x128xf32>
    %180 = arith.mulf %171, %145 : vector<8x128xf32>
    %181 = arith.addf %179, %180 : vector<8x128xf32>
    %182 = arith.index_cast %c4_i32 : i32 to index
    %c0_44 = arith.constant 0 : index
    %c0_45 = arith.constant 0 : index
    %183 = vector.load %arg4[%182, %c0_44, %c0_45] : memref<8x8x128xf32, #tpu.memory_space<vmem>>, vector<1x8x128xf32>
    %184 = vector.shape_cast %183 : vector<1x8x128xf32> to vector<8x128xf32>
    %185 = vector.shape_cast %181 : vector<8x128xf32> to vector<1x8x128xf32>
    tpu.vector_store %arg4[%182, %c0_44, %c0_45], %185 {strides = array<i32>} : memref<8x8x128xf32, #tpu.memory_space<vmem>>, vector<1x8x128xf32>,
    %c5_i32 = arith.constant 5 : i32
    %cst_46 = arith.constant dense<0.000000e+00> : vector<8x384xf32>
    %186 = tpu.matmul %181, %3, %cst_46 {dimension_numbers = #tpu.dot_dimension_numbers<[1], [0], [0], [1], [0, 0, 1, 1], [], []>} : vector<8x128xf32>, vector<128x384xf32>, vector<8x384xf32> -> vector<8x384xf32>
    %187 = vector.broadcast %4 : vector<1x384xf32> to vector<8x384xf32>
    %188 = arith.addf %186, %187 : vector<8x384xf32>
    %189 = arith.index_cast %c5_i32 : i32 to index
    %c0_47 = arith.constant 0 : index
    %c0_48 = arith.constant 0 : index
    %190 = vector.load %arg1[%189, %c0_47, %c0_48] : memref<8x8x384xf32, #tpu.memory_space<vmem>>, vector<1x8x384xf32>
    %191 = vector.shape_cast %190 : vector<1x8x384xf32> to vector<8x384xf32>
    %192 = vector.extract_strided_slice %191 {offsets = [0, 0], sizes = [8, 128], strides = [1, 1]} : vector<8x384xf32> to vector<8x128xf32>
    %193 = vector.extract_strided_slice %188 {offsets = [0, 0], sizes = [8, 128], strides = [1, 1]} : vector<8x384xf32> to vector<8x128xf32>
    %194 = arith.addf %192, %193 : vector<8x128xf32>
    %195 = arith.negf %194 : vector<8x128xf32>
    %196 = math.exp %195 : vector<8x128xf32>
    %cst_49 = arith.constant 1.000000e+00 : f32
    %197 = vector.broadcast %cst_49 : f32 to vector<8x128xf32>
    %198 = arith.addf %197, %196 : vector<8x128xf32>
    %199 = arith.divf %197, %198 : vector<8x128xf32>
    %200 = vector.extract_strided_slice %191 {offsets = [0, 128], sizes = [8, 128], strides = [1, 1]} : vector<8x384xf32> to vector<8x128xf32>
    %201 = vector.extract_strided_slice %188 {offsets = [0, 128], sizes = [8, 128], strides = [1, 1]} : vector<8x384xf32> to vector<8x128xf32>
    %202 = arith.addf %200, %201 : vector<8x128xf32>
    %203 = arith.negf %202 : vector<8x128xf32>
    %204 = math.exp %203 : vector<8x128xf32>
    %cst_50 = arith.constant 1.000000e+00 : f32
    %205 = vector.broadcast %cst_50 : f32 to vector<8x128xf32>
    %206 = arith.addf %205, %204 : vector<8x128xf32>
    %207 = arith.divf %205, %206 : vector<8x128xf32>
    %208 = vector.extract_strided_slice %191 {offsets = [0, 256], sizes = [8, 128], strides = [1, 1]} : vector<8x384xf32> to vector<8x128xf32>
    %209 = vector.extract_strided_slice %188 {offsets = [0, 256], sizes = [8, 128], strides = [1, 1]} : vector<8x384xf32> to vector<8x128xf32>
    %210 = arith.mulf %199, %209 : vector<8x128xf32>
    %211 = arith.addf %208, %210 : vector<8x128xf32>
    %212 = math.tanh %211 : vector<8x128xf32>
    %cst_51 = arith.constant 1.000000e+00 : f32
    %213 = vector.broadcast %cst_51 : f32 to vector<8x128xf32>
    %214 = arith.subf %213, %207 : vector<8x128xf32>
    %215 = arith.mulf %214, %212 : vector<8x128xf32>
    %216 = arith.mulf %207, %181 : vector<8x128xf32>
    %217 = arith.addf %215, %216 : vector<8x128xf32>
    %218 = arith.index_cast %c5_i32 : i32 to index
    %c0_52 = arith.constant 0 : index
    %c0_53 = arith.constant 0 : index
    %219 = vector.load %arg4[%218, %c0_52, %c0_53] : memref<8x8x128xf32, #tpu.memory_space<vmem>>, vector<1x8x128xf32>
    %220 = vector.shape_cast %219 : vector<1x8x128xf32> to vector<8x128xf32>
    %221 = vector.shape_cast %217 : vector<8x128xf32> to vector<1x8x128xf32>
    tpu.vector_store %arg4[%218, %c0_52, %c0_53], %221 {strides = array<i32>} : memref<8x8x128xf32, #tpu.memory_space<vmem>>, vector<1x8x128xf32>,
    %c6_i32 = arith.constant 6 : i32
    %cst_54 = arith.constant dense<0.000000e+00> : vector<8x384xf32>
    %222 = tpu.matmul %217, %3, %cst_54 {dimension_numbers = #tpu.dot_dimension_numbers<[1], [0], [0], [1], [0, 0, 1, 1], [], []>} : vector<8x128xf32>, vector<128x384xf32>, vector<8x384xf32> -> vector<8x384xf32>
    %223 = vector.broadcast %4 : vector<1x384xf32> to vector<8x384xf32>
    %224 = arith.addf %222, %223 : vector<8x384xf32>
    %225 = arith.index_cast %c6_i32 : i32 to index
    %c0_55 = arith.constant 0 : index
    %c0_56 = arith.constant 0 : index
    %226 = vector.load %arg1[%225, %c0_55, %c0_56] : memref<8x8x384xf32, #tpu.memory_space<vmem>>, vector<1x8x384xf32>
    %227 = vector.shape_cast %226 : vector<1x8x384xf32> to vector<8x384xf32>
    %228 = vector.extract_strided_slice %227 {offsets = [0, 0], sizes = [8, 128], strides = [1, 1]} : vector<8x384xf32> to vector<8x128xf32>
    %229 = vector.extract_strided_slice %224 {offsets = [0, 0], sizes = [8, 128], strides = [1, 1]} : vector<8x384xf32> to vector<8x128xf32>
    %230 = arith.addf %228, %229 : vector<8x128xf32>
    %231 = arith.negf %230 : vector<8x128xf32>
    %232 = math.exp %231 : vector<8x128xf32>
    %cst_57 = arith.constant 1.000000e+00 : f32
    %233 = vector.broadcast %cst_57 : f32 to vector<8x128xf32>
    %234 = arith.addf %233, %232 : vector<8x128xf32>
    %235 = arith.divf %233, %234 : vector<8x128xf32>
    %236 = vector.extract_strided_slice %227 {offsets = [0, 128], sizes = [8, 128], strides = [1, 1]} : vector<8x384xf32> to vector<8x128xf32>
    %237 = vector.extract_strided_slice %224 {offsets = [0, 128], sizes = [8, 128], strides = [1, 1]} : vector<8x384xf32> to vector<8x128xf32>
    %238 = arith.addf %236, %237 : vector<8x128xf32>
    %239 = arith.negf %238 : vector<8x128xf32>
    %240 = math.exp %239 : vector<8x128xf32>
    %cst_58 = arith.constant 1.000000e+00 : f32
    %241 = vector.broadcast %cst_58 : f32 to vector<8x128xf32>
    %242 = arith.addf %241, %240 : vector<8x128xf32>
    %243 = arith.divf %241, %242 : vector<8x128xf32>
    %244 = vector.extract_strided_slice %227 {offsets = [0, 256], sizes = [8, 128], strides = [1, 1]} : vector<8x384xf32> to vector<8x128xf32>
    %245 = vector.extract_strided_slice %224 {offsets = [0, 256], sizes = [8, 128], strides = [1, 1]} : vector<8x384xf32> to vector<8x128xf32>
    %246 = arith.mulf %235, %245 : vector<8x128xf32>
    %247 = arith.addf %244, %246 : vector<8x128xf32>
    %248 = math.tanh %247 : vector<8x128xf32>
    %cst_59 = arith.constant 1.000000e+00 : f32
    %249 = vector.broadcast %cst_59 : f32 to vector<8x128xf32>
    %250 = arith.subf %249, %243 : vector<8x128xf32>
    %251 = arith.mulf %250, %248 : vector<8x128xf32>
    %252 = arith.mulf %243, %217 : vector<8x128xf32>
    %253 = arith.addf %251, %252 : vector<8x128xf32>
    %254 = arith.index_cast %c6_i32 : i32 to index
    %c0_60 = arith.constant 0 : index
    %c0_61 = arith.constant 0 : index
    %255 = vector.load %arg4[%254, %c0_60, %c0_61] : memref<8x8x128xf32, #tpu.memory_space<vmem>>, vector<1x8x128xf32>
    %256 = vector.shape_cast %255 : vector<1x8x128xf32> to vector<8x128xf32>
    %257 = vector.shape_cast %253 : vector<8x128xf32> to vector<1x8x128xf32>
    tpu.vector_store %arg4[%254, %c0_60, %c0_61], %257 {strides = array<i32>} : memref<8x8x128xf32, #tpu.memory_space<vmem>>, vector<1x8x128xf32>,
    %c7_i32 = arith.constant 7 : i32
    %cst_62 = arith.constant dense<0.000000e+00> : vector<8x384xf32>
    %258 = tpu.matmul %253, %3, %cst_62 {dimension_numbers = #tpu.dot_dimension_numbers<[1], [0], [0], [1], [0, 0, 1, 1], [], []>} : vector<8x128xf32>, vector<128x384xf32>, vector<8x384xf32> -> vector<8x384xf32>
    %259 = vector.broadcast %4 : vector<1x384xf32> to vector<8x384xf32>
    %260 = arith.addf %258, %259 : vector<8x384xf32>
    %261 = arith.index_cast %c7_i32 : i32 to index
    %c0_63 = arith.constant 0 : index
    %c0_64 = arith.constant 0 : index
    %262 = vector.load %arg1[%261, %c0_63, %c0_64] : memref<8x8x384xf32, #tpu.memory_space<vmem>>, vector<1x8x384xf32>
    %263 = vector.shape_cast %262 : vector<1x8x384xf32> to vector<8x384xf32>
    %264 = vector.extract_strided_slice %263 {offsets = [0, 0], sizes = [8, 128], strides = [1, 1]} : vector<8x384xf32> to vector<8x128xf32>
    %265 = vector.extract_strided_slice %260 {offsets = [0, 0], sizes = [8, 128], strides = [1, 1]} : vector<8x384xf32> to vector<8x128xf32>
    %266 = arith.addf %264, %265 : vector<8x128xf32>
    %267 = arith.negf %266 : vector<8x128xf32>
    %268 = math.exp %267 : vector<8x128xf32>
    %cst_65 = arith.constant 1.000000e+00 : f32
    %269 = vector.broadcast %cst_65 : f32 to vector<8x128xf32>
    %270 = arith.addf %269, %268 : vector<8x128xf32>
    %271 = arith.divf %269, %270 : vector<8x128xf32>
    %272 = vector.extract_strided_slice %263 {offsets = [0, 128], sizes = [8, 128], strides = [1, 1]} : vector<8x384xf32> to vector<8x128xf32>
    %273 = vector.extract_strided_slice %260 {offsets = [0, 128], sizes = [8, 128], strides = [1, 1]} : vector<8x384xf32> to vector<8x128xf32>
    %274 = arith.addf %272, %273 : vector<8x128xf32>
    %275 = arith.negf %274 : vector<8x128xf32>
    %276 = math.exp %275 : vector<8x128xf32>
    %cst_66 = arith.constant 1.000000e+00 : f32
    %277 = vector.broadcast %cst_66 : f32 to vector<8x128xf32>
    %278 = arith.addf %277, %276 : vector<8x128xf32>
    %279 = arith.divf %277, %278 : vector<8x128xf32>
    %280 = vector.extract_strided_slice %263 {offsets = [0, 256], sizes = [8, 128], strides = [1, 1]} : vector<8x384xf32> to vector<8x128xf32>
    %281 = vector.extract_strided_slice %260 {offsets = [0, 256], sizes = [8, 128], strides = [1, 1]} : vector<8x384xf32> to vector<8x128xf32>
    %282 = arith.mulf %271, %281 : vector<8x128xf32>
    %283 = arith.addf %280, %282 : vector<8x128xf32>
    %284 = math.tanh %283 : vector<8x128xf32>
    %cst_67 = arith.constant 1.000000e+00 : f32
    %285 = vector.broadcast %cst_67 : f32 to vector<8x128xf32>
    %286 = arith.subf %285, %279 : vector<8x128xf32>
    %287 = arith.mulf %286, %284 : vector<8x128xf32>
    %288 = arith.mulf %279, %253 : vector<8x128xf32>
    %289 = arith.addf %287, %288 : vector<8x128xf32>
    %290 = arith.index_cast %c7_i32 : i32 to index
    %c0_68 = arith.constant 0 : index
    %c0_69 = arith.constant 0 : index
    %291 = vector.load %arg4[%290, %c0_68, %c0_69] : memref<8x8x128xf32, #tpu.memory_space<vmem>>, vector<1x8x128xf32>
    %292 = vector.shape_cast %291 : vector<1x8x128xf32> to vector<8x128xf32>
    %293 = vector.shape_cast %289 : vector<8x128xf32> to vector<1x8x128xf32>
    tpu.vector_store %arg4[%290, %c0_68, %c0_69], %293 {strides = array<i32>} : memref<8x8x128xf32, #tpu.memory_space<vmem>>, vector<1x8x128xf32>,
    %c8_i32 = arith.constant 8 : i32
    %c0_70 = arith.constant 0 : index
    %c0_71 = arith.constant 0 : index
    %294 = vector.load %arg5[%c0_70, %c0_71] : memref<8x128xf32, #tpu.memory_space<vmem>>, vector<8x128xf32>
    tpu.vector_store %arg5[%c0_70, %c0_71], %289 {strides = array<i32>} : memref<8x128xf32, #tpu.memory_space<vmem>>, vector<8x128xf32>,
    return
  }
  func.func @transform_0(%arg0: i32) -> (i32, i32, i32) {
    %c0_i32 = arith.constant 0 : i32
    %c0_i32_0 = arith.constant 0 : i32
    %c0_i32_1 = arith.constant 0 : i32
    return %arg0, %c0_i32, %c0_i32_0 : i32, i32, i32
  }
  func.func @transform_1(%arg0: i32) -> (i32, i32) {
    %c0_i32 = arith.constant 0 : i32
    %c0_i32_0 = arith.constant 0 : i32
    %c0_i32_1 = arith.constant 0 : i32
    return %c0_i32, %c0_i32_0 : i32, i32
  }
  func.func @transform_2(%arg0: i32) -> (i32, i32) {
    %c0_i32 = arith.constant 0 : i32
    %c0_i32_0 = arith.constant 0 : i32
    %c0_i32_1 = arith.constant 0 : i32
    return %c0_i32, %c0_i32_0 : i32, i32
  }
  func.func @transform_3(%arg0: i32) -> (i32, i32, i32) {
    %c0_i32 = arith.constant 0 : i32
    %c0_i32_0 = arith.constant 0 : i32
    %c0_i32_1 = arith.constant 0 : i32
    return %arg0, %c0_i32, %c0_i32_0 : i32, i32, i32
  }
}

</mosaic_0001>

<llo_original>
// kernel: tpu_custom_call.1
$region0: #{tpu_custom_call.1}
  #allocation0 [shape = 'u32[]', space=smem, size = 0x4, offset = 0x4, fixed_abs, tag = 'smem constant byte address 0x4 - core index']
  #allocation1 [shape = 'u32[72,128]{1,0:T(1,128)}', space=vmem, size = 0x9000, scoped, tag = 'internal scratch']
  #allocation2 [shape = 'f32[8,128]{1,0:T(8,128)}', space=vmem, size = 0x1000, scoped, tag = 'scratch operand']
  %s0 = inlined_call_operand.hbm [shape: f32[8,8,384], index: 0, kind: input, shape index: {}]
  %s1 = inlined_call_operand.hbm [shape: f32[128,384], index: 1, kind: input, shape index: {}]
  %s2 = inlined_call_operand.hbm [shape: f32[1,384], index: 2, kind: input, shape index: {}]
  %s3 = inlined_call_operand.hbm [shape: f32[8,8,128], index: 3, kind: output, shape index: {}]
  %s4 = sld [smem:[#allocation0]]
  $region38: #{tpu_custom_call.1} parent=0
    _
  %s6 = ssub.s32 1, %s4
  %s7 = scalar_select 0, %s6, %s4
  $region1: #{tpu_custom_call.1} parent=0
    #allocation3 [shape = 'u8[98304]{0}', space=vmem, size = 0x18000, scoped, tag = 'input window, operand 0, single buffered']
    #allocation4 [shape = 's32[1]{0}', space=sflag, size = 0x4, scoped, tag = 'scoped memory for tpu_custom_call.1']
    #allocation5 [shape = 's32[1]{0}', space=sflag, size = 0x4, scoped, tag = 'scoped memory for tpu_custom_call.1']
    #allocation6 [shape = 'u8[196608]{0}', space=vmem, size = 0x30000, scoped, tag = 'input window, operand 1, single buffered']
    #allocation7 [shape = 's32[1]{0}', space=sflag, size = 0x4, scoped, tag = 'scoped memory for tpu_custom_call.1']
    #allocation8 [shape = 'u8[1536]{0}', space=vmem, size = 0x800, scoped, tag = 'input window, operand 2, single buffered']
    #allocation9 [shape = 'u8[32768]{0}', space=vmem, size = 0x8000, scoped, tag = 'output window, operand 0, single buffered']
    %8 = vsyncpa [#allocation4], 0
    %9 = vsyncpa [#allocation7], 0
    %10 = vsyncpa [#allocation5], 0
    // Predicated region
    $region2: #{tpu_custom_call.1} parent=1 // pred_check
      _
    $region3: #{tpu_custom_call.1} parent=1 // pred_check_branch
      %12 = sbr.rel (0) target = $region5
    $region4: #{tpu_custom_call.1} parent=1 // pred_region
      %14 = vsyncadd [#allocation4], 0
      %s15 = sshll.u32 %s0, 4
      %s16 = int_to_ptr.hbm [resolvable:$true] %s15
      %s17 = sshll.u32 [#allocation3], 4
      %s18 = int_to_ptr.vmem [resolvable:$true] %s17
      %23 = dma.hbm_to_vmem [thread:$0]  %s16, 3072, %s18, [#allocation4], 384, 384, 24
    $region5: #{tpu_custom_call.1} parent=1 // pred_fallthru
      _
    // Predicated region
    $region6: #{tpu_custom_call.1} parent=1 // pred_check
      _
    $region7: #{tpu_custom_call.1} parent=1 // pred_check_branch
      %25 = sbr.rel (0) target = $region9
    $region8: #{tpu_custom_call.1} parent=1 // pred_region
      %27 = vsyncadd [#allocation7], 0
      %s28 = sshll.u32 %s1, 4
      %s29 = int_to_ptr.hbm [resolvable:$true] %s28
      %s30 = sshll.u32 [#allocation6], 4
      %s31 = int_to_ptr.vmem [resolvable:$true] %s30
      %36 = dma.hbm_to_vmem [thread:$0]  %s29, 6144, %s31, [#allocation7], 384, 384, 24
    $region9: #{tpu_custom_call.1} parent=1 // pred_fallthru
      _
    // Predicated region
    $region10: #{tpu_custom_call.1} parent=1 // pred_check
      _
    $region11: #{tpu_custom_call.1} parent=1 // pred_check_branch
      %38 = sbr.rel (0) target = $region13
    $region12: #{tpu_custom_call.1} parent=1 // pred_region
      %40 = vsyncadd [#allocation7], 0
      %s42 = sshll.u32 %s2, 4
      %s43 = int_to_ptr.hbm [resolvable:$true] %s42
      %s44 = sshll.u32 [#allocation8], 4
      %s45 = int_to_ptr.vmem [resolvable:$true] %s44
      %47 = dma.hbm_to_vmem [thread:$0]  %s43, 48, %s45, [#allocation7]
    $region13: #{tpu_custom_call.1} parent=1 // pred_fallthru
      _
    // Predicated region
    $region14: #{tpu_custom_call.1} parent=1 // pred_check
      _
    $region15: #{tpu_custom_call.1} parent=1 // pred_check_branch
      %49 = sbr.rel (0) target = $region17
    $region16: #{tpu_custom_call.1} parent=1 // pred_region
      %51 = dma.done [#allocation4], 3072
    $region17: #{tpu_custom_call.1} parent=1 // pred_fallthru
      _
    // Predicated region
    $region18: #{tpu_custom_call.1} parent=1 // pred_check
      _
    $region19: #{tpu_custom_call.1} parent=1 // pred_check_branch
      %53 = sbr.rel (0) target = $region21
    $region20: #{tpu_custom_call.1} parent=1 // pred_region
      %55 = dma.done [#allocation7], 6144
    $region21: #{tpu_custom_call.1} parent=1 // pred_fallthru
      _
    // Predicated region
    $region22: #{tpu_custom_call.1} parent=1 // pred_check
      _
    $region23: #{tpu_custom_call.1} parent=1 // pred_check_branch
      %57 = sbr.rel (0) target = $region25
    $region24: #{tpu_custom_call.1} parent=1 // pred_region
      %59 = dma.done [#allocation7], 48
    $region25: #{tpu_custom_call.1} parent=1 // pred_fallthru
      _
    %p60 = scmp.eq.s32.totalorder 0, 0
    // Predicated region
    $region26: #{tpu_custom_call.1} parent=1 // pred_check
      %p61 = pneg %p60
    $region27: #{tpu_custom_call.1} parent=1 // pred_check_branch
      %63 = sbr.rel (%p61) target = $region29
    $region28: #{tpu_custom_call.1} parent=1 // pred_region
      %64 = vst [vmem:[#allocation2] sm:$0xff] 0.0
    $region29: #{tpu_custom_call.1} parent=1 // pred_fallthru
      _
    %v65 = vld [vmem:[#allocation6] sm:$0xff]
    %v66 = vld [vmem:[#allocation6 + $0x8] sm:$0xff]
    %v67 = vld [vmem:[#allocation6 + $0x10] sm:$0xff]
    %v68 = vld [vmem:[#allocation6 + $0x18] sm:$0xff]
    %v69 = vld [vmem:[#allocation6 + $0x20] sm:$0xff]
    %v70 = vld [vmem:[#allocation6 + $0x28] sm:$0xff]
    %v71 = vld [vmem:[#allocation6 + $0x30] sm:$0xff]
    %v72 = vld [vmem:[#allocation6 + $0x38] sm:$0xff]
    %v73 = vld [vmem:[#allocation6 + $0x40] sm:$0xff]
    %v74 = vld [vmem:[#allocation6 + $0x48] sm:$0xff]
    %v75 = vld [vmem:[#allocation6 + $0x50] sm:$0xff]
    %v76 = vld [vmem:[#allocation6 + $0x58] sm:$0xff]
    %v77 = vld [vmem:[#allocation6 + $0x60] sm:$0xff]
    %v78 = vld [vmem:[#allocation6 + $0x68] sm:$0xff]
    %v79 = vld [vmem:[#allocation6 + $0x70] sm:$0xff]
    %v80 = vld [vmem:[#allocation6 + $0x78] sm:$0xff]
    %v81 = vld [vmem:[#allocation6 + $0x80] sm:$0xff]
    %v82 = vld [vmem:[#allocation6 + $0x88] sm:$0xff]
    %v83 = vld [vmem:[#allocation6 + $0x90] sm:$0xff]
    %v84 = vld [vmem:[#allocation6 + $0x98] sm:$0xff]
    %v85 = vld [vmem:[#allocation6 + $0xa0] sm:$0xff]
    %v86 = vld [vmem:[#allocation6 + $0xa8] sm:$0xff]
    %v87 = vld [vmem:[#allocation6 + $0xb0] sm:$0xff]
    %v88 = vld [vmem:[#allocation6 + $0xb8] sm:$0xff]
    %v89 = vld [vmem:[#allocation6 + $0xc0] sm:$0xff]
    %v90 = vld [vmem:[#allocation6 + $0xc8] sm:$0xff]
    %v91 = vld [vmem:[#allocation6 + $0xd0] sm:$0xff]
    %v92 = vld [vmem:[#allocation6 + $0xd8] sm:$0xff]
    %v93 = vld [vmem:[#allocation6 + $0xe0] sm:$0xff]
    %v94 = vld [vmem:[#allocation6 + $0xe8] sm:$0xff]
    %v95 = vld [vmem:[#allocation6 + $0xf0] sm:$0xff]
    %v96 = vld [vmem:[#allocation6 + $0xf8] sm:$0xff]
    %v97 = vld [vmem:[#allocation6 + $0x100] sm:$0xff]
    %v98 = vld [vmem:[#allocation6 + $0x108] sm:$0xff]
    %v99 = vld [vmem:[#allocation6 + $0x110] sm:$0xff]
    %v100 = vld [vmem:[#allocation6 + $0x118] sm:$0xff]
    %v101 = vld [vmem:[#allocation6 + $0x120] sm:$0xff]
    %v102 = vld [vmem:[#allocation6 + $0x128] sm:$0xff]
    %v103 = vld [vmem:[#allocation6 + $0x130] sm:$0xff]
    %v104 = vld [vmem:[#allocation6 + $0x138] sm:$0xff]
    %v105 = vld [vmem:[#allocation6 + $0x140] sm:$0xff]
    %v106 = vld [vmem:[#allocation6 + $0x148] sm:$0xff]
    %v107 = vld [vmem:[#allocation6 + $0x150] sm:$0xff]
    %v108 = vld [vmem:[#allocation6 + $0x158] sm:$0xff]
    %v109 = vld [vmem:[#allocation6 + $0x160] sm:$0xff]
    %v110 = vld [vmem:[#allocation6 + $0x168] sm:$0xff]
    %v111 = vld [vmem:[#allocation6 + $0x170] sm:$0xff]
    %v112 = vld [vmem:[#allocation6 + $0x178] sm:$0xff]
    %v113 = vld [vmem:[#allocation8] sm:$0x7]
    %v114 = vld [vmem:[#allocation2] sm:$0xff]
    %v116 = vperm.slane %v113, 0
    %v117 = vperm.slane %v113, 1
    %v118 = vperm.slane %v113, 2
    %122 = vmatpush.msra.mxu0 %v110
    %123 = vmatpush.msra.mxu0 %v107
    %124 = vmatpush.msra.mxu0 %v104
    %125 = vmatpush.msra.mxu0 %v101
    %126 = vmatpush.msra.mxu0 %v98
    %127 = vmatpush.msra.mxu0 %v95
    %128 = vmatpush.msra.mxu0 %v92
    %129 = vmatpush.msra.mxu0 %v89
    %130 = vmatpush.msra.mxu0 %v86
    %131 = vmatpush.msra.mxu0 %v83
    %132 = vmatpush.msra.mxu0 %v80
    %133 = vmatpush.msra.mxu0 %v77
    %134 = vmatpush.msra.mxu0 %v74
    %135 = vmatpush.msra.mxu0 %v71
    %136 = vmatpush.msra.mxu0 %v68
    %137 = vmatpush.msra.mxu0 %v65
    %138 = vmatmul.f32.gmra.mxu0 %v114
    %v139 = vpop.f32.mrf.mxu0
    %v140 = vadd.f32 %v116, %v139
    %141 = vdwg.mxu0
    %142 = vmatpush.msra.mxu0 %v111
    %143 = vmatpush.msra.mxu0 %v108
    %144 = vmatpush.msra.mxu0 %v105
    %145 = vmatpush.msra.mxu0 %v102
    %146 = vmatpush.msra.mxu0 %v99
    %147 = vmatpush.msra.mxu0 %v96
    %148 = vmatpush.msra.mxu0 %v93
    %149 = vmatpush.msra.mxu0 %v90
    %150 = vmatpush.msra.mxu0 %v87
    %151 = vmatpush.msra.mxu0 %v84
    %152 = vmatpush.msra.mxu0 %v81
    %153 = vmatpush.msra.mxu0 %v78
    %154 = vmatpush.msra.mxu0 %v75
    %155 = vmatpush.msra.mxu0 %v72
    %156 = vmatpush.msra.mxu0 %v69
    %157 = vmatpush.msra.mxu0 %v66
    %158 = vmatmul.f32.gmra.mxu0 %v114
    %v159 = vpop.f32.mrf.mxu0
    %v160 = vadd.f32 %v117, %v159
    %161 = vdwg.mxu0
    %162 = vmatpush.msra.mxu0 %v112
    %163 = vmatpush.msra.mxu0 %v109
    %164 = vmatpush.msra.mxu0 %v106
    %165 = vmatpush.msra.mxu0 %v103
    %166 = vmatpush.msra.mxu0 %v100
    %167 = vmatpush.msra.mxu0 %v97
    %168 = vmatpush.msra.mxu0 %v94
    %169 = vmatpush.msra.mxu0 %v91
    %170 = vmatpush.msra.mxu0 %v88
    %171 = vmatpush.msra.mxu0 %v85
    %172 = vmatpush.msra.mxu0 %v82
    %173 = vmatpush.msra.mxu0 %v79
    %174 = vmatpush.msra.mxu0 %v76
    %175 = vmatpush.msra.mxu0 %v73
    %176 = vmatpush.msra.mxu0 %v70
    %177 = vmatpush.msra.mxu0 %v67
    %178 = vmatmul.f32.gmra.mxu0 %v114
    %v179 = vpop.f32.mrf.mxu0
    %v180 = vadd.f32 %v118, %v179
    %181 = vdwg.mxu0
    %v182 = vld [vmem:[#allocation3] sm:$0xff]
    %v183 = vld [vmem:[#allocation3 + $0x8] sm:$0xff]
    %v184 = vld [vmem:[#allocation3 + $0x10] sm:$0xff]
    %v185 = vadd.f32 %v182, %v140
    %v186 = vxor.u32 %v185, 2147483648
    %v187 = vmul.f32 %v186, 1.442695
    %v188 = vpow.pop %v187
    %v189 = vadd.f32 %v188, 1.0
    %v190 = vrcp.pop %v189
    %v191 = vmul.f32 %v189, %v190
    %v192 = vsub.f32 1.0, %v191
    %v193 = vmul.f32 %v190, %v192
    %v194 = vadd.f32 %v190, %v193
    %vm195 = vweird.f32 %v189
    %vm196 = vweird.f32 %v190
    %vm197 = vmor %vm195, %vm196
    %v198 = vsel %vm197, %v190, %v194
    %v199 = vand.u32 2147483647, %v189
    %vm200 = vcmp.eq.f32.partialorder %v199, 8.507059e+37
    %v201 = vand.u32 %v189, 2147483648
    %v202 = vor.u32 1.1754944e-38, %v201
    %v203 = vsel %vm200, %v202, %v198
    %v204 = vmul.f32 1.0, %v203
    %v205 = vadd.f32 %v183, %v160
    %v206 = vxor.u32 %v205, 2147483648
    %v207 = vmul.f32 %v206, 1.442695
    %v208 = vpow.pop %v207
    %v209 = vadd.f32 %v208, 1.0
    %v210 = vrcp.pop %v209
    %v211 = vmul.f32 %v209, %v210
    %v212 = vsub.f32 1.0, %v211
    %v213 = vmul.f32 %v210, %v212
    %v214 = vadd.f32 %v210, %v213
    %vm215 = vweird.f32 %v209
    %vm216 = vweird.f32 %v210
    %vm217 = vmor %vm215, %vm216
    %v218 = vsel %vm217, %v210, %v214
    %v219 = vand.u32 2147483647, %v209
    %vm220 = vcmp.eq.f32.partialorder %v219, 8.507059e+37
    %v221 = vand.u32 %v209, 2147483648
    %v222 = vor.u32 1.1754944e-38, %v221
    %v223 = vsel %vm220, %v222, %v218
    %v224 = vmul.f32 1.0, %v223
    %v225 = vmul.f32 %v204, %v180
    %v226 = vadd.f32 %v184, %v225
    %v227 = vtanh.pop %v226
    %v228 = vsub.f32 1.0, %v224
    %v229 = vmul.f32 %v228, %v227
    %v230 = vmul.f32 %v224, %v114
    %v231 = vadd.f32 %v229, %v230
    %232 = vst [vmem:[#allocation9] sm:$0xff] %v231
    %233 = vmatpush.msra.mxu0 %v110
    %234 = vmatpush.msra.mxu0 %v107
    %235 = vmatpush.msra.mxu0 %v104
    %236 = vmatpush.msra.mxu0 %v101
    %237 = vmatpush.msra.mxu0 %v98
    %238 = vmatpush.msra.mxu0 %v95
    %239 = vmatpush.msra.mxu0 %v92
    %240 = vmatpush.msra.mxu0 %v89
    %241 = vmatpush.msra.mxu0 %v86
    %242 = vmatpush.msra.mxu0 %v83
    %243 = vmatpush.msra.mxu0 %v80
    %244 = vmatpush.msra.mxu0 %v77
    %245 = vmatpush.msra.mxu0 %v74
    %246 = vmatpush.msra.mxu0 %v71
    %247 = vmatpush.msra.mxu0 %v68
    %248 = vmatpush.msra.mxu0 %v65
    %249 = vmatmul.f32.gmra.mxu0 %v231
    %v250 = vpop.f32.mrf.mxu0
    %v251 = vadd.f32 %v116, %v250
    %252 = vdwg.mxu0
    %253 = vmatpush.msra.mxu0 %v111
    %254 = vmatpush.msra.mxu0 %v108
    %255 = vmatpush.msra.mxu0 %v105
    %256 = vmatpush.msra.mxu0 %v102
    %257 = vmatpush.msra.mxu0 %v99
    %258 = vmatpush.msra.mxu0 %v96
    %259 = vmatpush.msra.mxu0 %v93
    %260 = vmatpush.msra.mxu0 %v90
    %261 = vmatpush.msra.mxu0 %v87
    %262 = vmatpush.msra.mxu0 %v84
    %263 = vmatpush.msra.mxu0 %v81
    %264 = vmatpush.msra.mxu0 %v78
    %265 = vmatpush.msra.mxu0 %v75
    %266 = vmatpush.msra.mxu0 %v72
    %267 = vmatpush.msra.mxu0 %v69
    %268 = vmatpush.msra.mxu0 %v66
    %269 = vmatmul.f32.gmra.mxu0 %v231
    %v270 = vpop.f32.mrf.mxu0
    %v271 = vadd.f32 %v117, %v270
    %272 = vdwg.mxu0
    %273 = vmatpush.msra.mxu0 %v112
    %274 = vmatpush.msra.mxu0 %v109
    %275 = vmatpush.msra.mxu0 %v106
    %276 = vmatpush.msra.mxu0 %v103
    %277 = vmatpush.msra.mxu0 %v100
    %278 = vmatpush.msra.mxu0 %v97
    %279 = vmatpush.msra.mxu0 %v94
    %280 = vmatpush.msra.mxu0 %v91
    %281 = vmatpush.msra.mxu0 %v88
    %282 = vmatpush.msra.mxu0 %v85
    %283 = vmatpush.msra.mxu0 %v82
    %284 = vmatpush.msra.mxu0 %v79
    %285 = vmatpush.msra.mxu0 %v76
    %286 = vmatpush.msra.mxu0 %v73
    %287 = vmatpush.msra.mxu0 %v70
    %288 = vmatpush.msra.mxu0 %v67
    %289 = vmatmul.f32.gmra.mxu0 %v231
    %v290 = vpop.f32.mrf.mxu0
    %v291 = vadd.f32 %v118, %v290
    %292 = vdwg.mxu0
    %s293 = scalar_lea.vmem [#allocation3], 24
    %v294 = vld [vmem:[%s293] sm:$0xff]
    %v295 = vld [vmem:[%s293 + $0x8] sm:$0xff]
    %v296 = vld [vmem:[%s293 + $0x10] sm:$0xff]
    %v297 = vadd.f32 %v294, %v251
    %v298 = vxor.u32 %v297, 2147483648
    %v299 = vmul.f32 %v298, 1.442695
    %v300 = vpow.pop %v299
    %v301 = vadd.f32 %v300, 1.0
    %v302 = vrcp.pop %v301
    %v303 = vmul.f32 %v301, %v302
    %v304 = vsub.f32 1.0, %v303
    %v305 = vmul.f32 %v302, %v304
    %v306 = vadd.f32 %v302, %v305
    %vm307 = vweird.f32 %v301
    %vm308 = vweird.f32 %v302
    %vm309 = vmor %vm307, %vm308
    %v310 = vsel %vm309, %v302, %v306
    %v311 = vand.u32 2147483647, %v301
    %vm312 = vcmp.eq.f32.partialorder %v311, 8.507059e+37
    %v313 = vand.u32 %v301, 2147483648
    %v314 = vor.u32 1.1754944e-38, %v313
    %v315 = vsel %vm312, %v314, %v310
    %v316 = vmul.f32 1.0, %v315
    %v317 = vadd.f32 %v295, %v271
    %v318 = vxor.u32 %v317, 2147483648
    %v319 = vmul.f32 %v318, 1.442695
    %v320 = vpow.pop %v319
    %v321 = vadd.f32 %v320, 1.0
    %v322 = vrcp.pop %v321
    %v323 = vmul.f32 %v321, %v322
    %v324 = vsub.f32 1.0, %v323
    %v325 = vmul.f32 %v322, %v324
    %v326 = vadd.f32 %v322, %v325
    %vm327 = vweird.f32 %v321
    %vm328 = vweird.f32 %v322
    %vm329 = vmor %vm327, %vm328
    %v330 = vsel %vm329, %v322, %v326
    %v331 = vand.u32 2147483647, %v321
    %vm332 = vcmp.eq.f32.partialorder %v331, 8.507059e+37
    %v333 = vand.u32 %v321, 2147483648
    %v334 = vor.u32 1.1754944e-38, %v333
    %v335 = vsel %vm332, %v334, %v330
    %v336 = vmul.f32 1.0, %v335
    %v337 = vmul.f32 %v316, %v291
    %v338 = vadd.f32 %v296, %v337
    %v339 = vtanh.pop %v338
    %v340 = vsub.f32 1.0, %v336
    %v341 = vmul.f32 %v340, %v339
    %v342 = vmul.f32 %v336, %v231
    %v343 = vadd.f32 %v341, %v342
    %s344 = scalar_lea.vmem [#allocation9], 8
    %345 = vst [vmem:[%s344] sm:$0xff] %v343
    %346 = vmatpush.msra.mxu0 %v110
    %347 = vmatpush.msra.mxu0 %v107
    %348 = vmatpush.msra.mxu0 %v104
    %349 = vmatpush.msra.mxu0 %v101
    %350 = vmatpush.msra.mxu0 %v98
    %351 = vmatpush.msra.mxu0 %v95
    %352 = vmatpush.msra.mxu0 %v92
    %353 = vmatpush.msra.mxu0 %v89
    %354 = vmatpush.msra.mxu0 %v86
    %355 = vmatpush.msra.mxu0 %v83
    %356 = vmatpush.msra.mxu0 %v80
    %357 = vmatpush.msra.mxu0 %v77
    %358 = vmatpush.msra.mxu0 %v74
    %359 = vmatpush.msra.mxu0 %v71
    %360 = vmatpush.msra.mxu0 %v68
    %361 = vmatpush.msra.mxu0 %v65
    %362 = vmatmul.f32.gmra.mxu0 %v343
    %v363 = vpop.f32.mrf.mxu0
    %v364 = vadd.f32 %v116, %v363
    %365 = vdwg.mxu0
    %366 = vmatpush.msra.mxu0 %v111
    %367 = vmatpush.msra.mxu0 %v108
    %368 = vmatpush.msra.mxu0 %v105
    %369 = vmatpush.msra.mxu0 %v102
    %370 = vmatpush.msra.mxu0 %v99
    %371 = vmatpush.msra.mxu0 %v96
    %372 = vmatpush.msra.mxu0 %v93
    %373 = vmatpush.msra.mxu0 %v90
    %374 = vmatpush.msra.mxu0 %v87
    %375 = vmatpush.msra.mxu0 %v84
    %376 = vmatpush.msra.mxu0 %v81
    %377 = vmatpush.msra.mxu0 %v78
    %378 = vmatpush.msra.mxu0 %v75
    %379 = vmatpush.msra.mxu0 %v72
    %380 = vmatpush.msra.mxu0 %v69
    %381 = vmatpush.msra.mxu0 %v66
    %382 = vmatmul.f32.gmra.mxu0 %v343
    %v383 = vpop.f32.mrf.mxu0
    %v384 = vadd.f32 %v117, %v383
    %385 = vdwg.mxu0
    %386 = vmatpush.msra.mxu0 %v112
    %387 = vmatpush.msra.mxu0 %v109
    %388 = vmatpush.msra.mxu0 %v106
    %389 = vmatpush.msra.mxu0 %v103
    %390 = vmatpush.msra.mxu0 %v100
    %391 = vmatpush.msra.mxu0 %v97
    %392 = vmatpush.msra.mxu0 %v94
    %393 = vmatpush.msra.mxu0 %v91
    %394 = vmatpush.msra.mxu0 %v88
    %395 = vmatpush.msra.mxu0 %v85
    %396 = vmatpush.msra.mxu0 %v82
    %397 = vmatpush.msra.mxu0 %v79
    %398 = vmatpush.msra.mxu0 %v76
    %399 = vmatpush.msra.mxu0 %v73
    %400 = vmatpush.msra.mxu0 %v70
    %401 = vmatpush.msra.mxu0 %v67
    %402 = vmatmul.f32.gmra.mxu0 %v343
    %v403 = vpop.f32.mrf.mxu0
    %v404 = vadd.f32 %v118, %v403
    %405 = vdwg.mxu0
    %s406 = scalar_lea.vmem [#allocation3], 48
    %v407 = vld [vmem:[%s406] sm:$0xff]
    %v408 = vld [vmem:[%s406 + $0x8] sm:$0xff]
    %v409 = vld [vmem:[%s406 + $0x10] sm:$0xff]
    %v410 = vadd.f32 %v407, %v364
    %v411 = vxor.u32 %v410, 2147483648
    %v412 = vmul.f32 %v411, 1.442695
    %v413 = vpow.pop %v412
    %v414 = vadd.f32 %v413, 1.0
    %v415 = vrcp.pop %v414
    %v416 = vmul.f32 %v414, %v415
    %v417 = vsub.f32 1.0, %v416
    %v418 = vmul.f32 %v415, %v417
    %v419 = vadd.f32 %v415, %v418
    %vm420 = vweird.f32 %v414
    %vm421 = vweird.f32 %v415
    %vm422 = vmor %vm420, %vm421
    %v423 = vsel %vm422, %v415, %v419
    %v424 = vand.u32 2147483647, %v414
    %vm425 = vcmp.eq.f32.partialorder %v424, 8.507059e+37
    %v426 = vand.u32 %v414, 2147483648
    %v427 = vor.u32 1.1754944e-38, %v426
    %v428 = vsel %vm425, %v427, %v423
    %v429 = vmul.f32 1.0, %v428
    %v430 = vadd.f32 %v408, %v384
    %v431 = vxor.u32 %v430, 2147483648
    %v432 = vmul.f32 %v431, 1.442695
    %v433 = vpow.pop %v432
    %v434 = vadd.f32 %v433, 1.0
    %v435 = vrcp.pop %v434
    %v436 = vmul.f32 %v434, %v435
    %v437 = vsub.f32 1.0, %v436
    %v438 = vmul.f32 %v435, %v437
    %v439 = vadd.f32 %v435, %v438
    %vm440 = vweird.f32 %v434
    %vm441 = vweird.f32 %v435
    %vm442 = vmor %vm440, %vm441
    %v443 = vsel %vm442, %v435, %v439
    %v444 = vand.u32 2147483647, %v434
    %vm445 = vcmp.eq.f32.partialorder %v444, 8.507059e+37
    %v446 = vand.u32 %v434, 2147483648
    %v447 = vor.u32 1.1754944e-38, %v446
    %v448 = vsel %vm445, %v447, %v443
    %v449 = vmul.f32 1.0, %v448
    %v450 = vmul.f32 %v429, %v404
    %v451 = vadd.f32 %v409, %v450
    %v452 = vtanh.pop %v451
    %v453 = vsub.f32 1.0, %v449
    %v454 = vmul.f32 %v453, %v452
    %v455 = vmul.f32 %v449, %v343
    %v456 = vadd.f32 %v454, %v455
    %s457 = scalar_lea.vmem [#allocation9], 16
    %458 = vst [vmem:[%s457] sm:$0xff] %v456
    %459 = vmatpush.msra.mxu0 %v110
    %460 = vmatpush.msra.mxu0 %v107
    %461 = vmatpush.msra.mxu0 %v104
    %462 = vmatpush.msra.mxu0 %v101
    %463 = vmatpush.msra.mxu0 %v98
    %464 = vmatpush.msra.mxu0 %v95
    %465 = vmatpush.msra.mxu0 %v92
    %466 = vmatpush.msra.mxu0 %v89
    %467 = vmatpush.msra.mxu0 %v86
    %468 = vmatpush.msra.mxu0 %v83
    %469 = vmatpush.msra.mxu0 %v80
    %470 = vmatpush.msra.mxu0 %v77
    %471 = vmatpush.msra.mxu0 %v74
    %472 = vmatpush.msra.mxu0 %v71
    %473 = vmatpush.msra.mxu0 %v68
    %474 = vmatpush.msra.mxu0 %v65
    %475 = vmatmul.f32.gmra.mxu0 %v456
    %v476 = vpop.f32.mrf.mxu0
    %v477 = vadd.f32 %v116, %v476
    %478 = vdwg.mxu0
    %479 = vmatpush.msra.mxu0 %v111
    %480 = vmatpush.msra.mxu0 %v108
    %481 = vmatpush.msra.mxu0 %v105
    %482 = vmatpush.msra.mxu0 %v102
    %483 = vmatpush.msra.mxu0 %v99
    %484 = vmatpush.msra.mxu0 %v96
    %485 = vmatpush.msra.mxu0 %v93
    %486 = vmatpush.msra.mxu0 %v90
    %487 = vmatpush.msra.mxu0 %v87
    %488 = vmatpush.msra.mxu0 %v84
    %489 = vmatpush.msra.mxu0 %v81
    %490 = vmatpush.msra.mxu0 %v78
    %491 = vmatpush.msra.mxu0 %v75
    %492 = vmatpush.msra.mxu0 %v72
    %493 = vmatpush.msra.mxu0 %v69
    %494 = vmatpush.msra.mxu0 %v66
    %495 = vmatmul.f32.gmra.mxu0 %v456
    %v496 = vpop.f32.mrf.mxu0
    %v497 = vadd.f32 %v117, %v496
    %498 = vdwg.mxu0
    %499 = vmatpush.msra.mxu0 %v112
    %500 = vmatpush.msra.mxu0 %v109
    %501 = vmatpush.msra.mxu0 %v106
    %502 = vmatpush.msra.mxu0 %v103
    %503 = vmatpush.msra.mxu0 %v100
    %504 = vmatpush.msra.mxu0 %v97
    %505 = vmatpush.msra.mxu0 %v94
    %506 = vmatpush.msra.mxu0 %v91
    %507 = vmatpush.msra.mxu0 %v88
    %508 = vmatpush.msra.mxu0 %v85
    %509 = vmatpush.msra.mxu0 %v82
    %510 = vmatpush.msra.mxu0 %v79
    %511 = vmatpush.msra.mxu0 %v76
    %512 = vmatpush.msra.mxu0 %v73
    %513 = vmatpush.msra.mxu0 %v70
    %514 = vmatpush.msra.mxu0 %v67
    %515 = vmatmul.f32.gmra.mxu0 %v456
    %v516 = vpop.f32.mrf.mxu0
    %v517 = vadd.f32 %v118, %v516
    %518 = vdwg.mxu0
    %s519 = scalar_lea.vmem [#allocation3], 72
    %v520 = vld [vmem:[%s519] sm:$0xff]
    %v521 = vld [vmem:[%s519 + $0x8] sm:$0xff]
    %v522 = vld [vmem:[%s519 + $0x10] sm:$0xff]
    %v523 = vadd.f32 %v520, %v477
    %v524 = vxor.u32 %v523, 2147483648
    %v525 = vmul.f32 %v524, 1.442695
    %v526 = vpow.pop %v525
    %v527 = vadd.f32 %v526, 1.0
    %v528 = vrcp.pop %v527
    %v529 = vmul.f32 %v527, %v528
    %v530 = vsub.f32 1.0, %v529
    %v531 = vmul.f32 %v528, %v530
    %v532 = vadd.f32 %v528, %v531
    %vm533 = vweird.f32 %v527
    %vm534 = vweird.f32 %v528
    %vm535 = vmor %vm533, %vm534
    %v536 = vsel %vm535, %v528, %v532
    %v537 = vand.u32 2147483647, %v527
    %vm538 = vcmp.eq.f32.partialorder %v537, 8.507059e+37
    %v539 = vand.u32 %v527, 2147483648
    %v540 = vor.u32 1.1754944e-38, %v539
    %v541 = vsel %vm538, %v540, %v536
    %v542 = vmul.f32 1.0, %v541
    %v543 = vadd.f32 %v521, %v497
    %v544 = vxor.u32 %v543, 2147483648
    %v545 = vmul.f32 %v544, 1.442695
    %v546 = vpow.pop %v545
    %v547 = vadd.f32 %v546, 1.0
    %v548 = vrcp.pop %v547
    %v549 = vmul.f32 %v547, %v548
    %v550 = vsub.f32 1.0, %v549
    %v551 = vmul.f32 %v548, %v550
    %v552 = vadd.f32 %v548, %v551
    %vm553 = vweird.f32 %v547
    %vm554 = vweird.f32 %v548
    %vm555 = vmor %vm553, %vm554
    %v556 = vsel %vm555, %v548, %v552
    %v557 = vand.u32 2147483647, %v547
    %vm558 = vcmp.eq.f32.partialorder %v557, 8.507059e+37
    %v559 = vand.u32 %v547, 2147483648
    %v560 = vor.u32 1.1754944e-38, %v559
    %v561 = vsel %vm558, %v560, %v556
    %v562 = vmul.f32 1.0, %v561
    %v563 = vmul.f32 %v542, %v517
    %v564 = vadd.f32 %v522, %v563
    %v565 = vtanh.pop %v564
    %v566 = vsub.f32 1.0, %v562
    %v567 = vmul.f32 %v566, %v565
    %v568 = vmul.f32 %v562, %v456
    %v569 = vadd.f32 %v567, %v568
    %s570 = scalar_lea.vmem [#allocation9], 24
    %571 = vst [vmem:[%s570] sm:$0xff] %v569
    %572 = vmatpush.msra.mxu0 %v110
    %573 = vmatpush.msra.mxu0 %v107
    %574 = vmatpush.msra.mxu0 %v104
    %575 = vmatpush.msra.mxu0 %v101
    %576 = vmatpush.msra.mxu0 %v98
    %577 = vmatpush.msra.mxu0 %v95
    %578 = vmatpush.msra.mxu0 %v92
    %579 = vmatpush.msra.mxu0 %v89
    %580 = vmatpush.msra.mxu0 %v86
    %581 = vmatpush.msra.mxu0 %v83
    %582 = vmatpush.msra.mxu0 %v80
    %583 = vmatpush.msra.mxu0 %v77
    %584 = vmatpush.msra.mxu0 %v74
    %585 = vmatpush.msra.mxu0 %v71
    %586 = vmatpush.msra.mxu0 %v68
    %587 = vmatpush.msra.mxu0 %v65
    %588 = vmatmul.f32.gmra.mxu0 %v569
    %v589 = vpop.f32.mrf.mxu0
    %v590 = vadd.f32 %v116, %v589
    %591 = vdwg.mxu0
    %592 = vmatpush.msra.mxu0 %v111
    %593 = vmatpush.msra.mxu0 %v108
    %594 = vmatpush.msra.mxu0 %v105
    %595 = vmatpush.msra.mxu0 %v102
    %596 = vmatpush.msra.mxu0 %v99
    %597 = vmatpush.msra.mxu0 %v96
    %598 = vmatpush.msra.mxu0 %v93
    %599 = vmatpush.msra.mxu0 %v90
    %600 = vmatpush.msra.mxu0 %v87
    %601 = vmatpush.msra.mxu0 %v84
    %602 = vmatpush.msra.mxu0 %v81
    %603 = vmatpush.msra.mxu0 %v78
    %604 = vmatpush.msra.mxu0 %v75
    %605 = vmatpush.msra.mxu0 %v72
    %606 = vmatpush.msra.mxu0 %v69
    %607 = vmatpush.msra.mxu0 %v66
    %608 = vmatmul.f32.gmra.mxu0 %v569
    %v609 = vpop.f32.mrf.mxu0
    %v610 = vadd.f32 %v117, %v609
    %611 = vdwg.mxu0
    %612 = vmatpush.msra.mxu0 %v112
    %613 = vmatpush.msra.mxu0 %v109
    %614 = vmatpush.msra.mxu0 %v106
    %615 = vmatpush.msra.mxu0 %v103
    %616 = vmatpush.msra.mxu0 %v100
    %617 = vmatpush.msra.mxu0 %v97
    %618 = vmatpush.msra.mxu0 %v94
    %619 = vmatpush.msra.mxu0 %v91
    %620 = vmatpush.msra.mxu0 %v88
    %621 = vmatpush.msra.mxu0 %v85
    %622 = vmatpush.msra.mxu0 %v82
    %623 = vmatpush.msra.mxu0 %v79
    %624 = vmatpush.msra.mxu0 %v76
    %625 = vmatpush.msra.mxu0 %v73
    %626 = vmatpush.msra.mxu0 %v70
    %627 = vmatpush.msra.mxu0 %v67
    %628 = vmatmul.f32.gmra.mxu0 %v569
    %v629 = vpop.f32.mrf.mxu0
    %v630 = vadd.f32 %v118, %v629
    %631 = vdwg.mxu0
    %s632 = scalar_lea.vmem [#allocation3], 96
    %v633 = vld [vmem:[%s632] sm:$0xff]
    %v634 = vld [vmem:[%s632 + $0x8] sm:$0xff]
    %v635 = vld [vmem:[%s632 + $0x10] sm:$0xff]
    %v636 = vadd.f32 %v633, %v590
    %v637 = vxor.u32 %v636, 2147483648
    %v638 = vmul.f32 %v637, 1.442695
    %v639 = vpow.pop %v638
    %v640 = vadd.f32 %v639, 1.0
    %v641 = vrcp.pop %v640
    %v642 = vmul.f32 %v640, %v641
    %v643 = vsub.f32 1.0, %v642
    %v644 = vmul.f32 %v641, %v643
    %v645 = vadd.f32 %v641, %v644
    %vm646 = vweird.f32 %v640
    %vm647 = vweird.f32 %v641
    %vm648 = vmor %vm646, %vm647
    %v649 = vsel %vm648, %v641, %v645
    %v650 = vand.u32 2147483647, %v640
    %vm651 = vcmp.eq.f32.partialorder %v650, 8.507059e+37
    %v652 = vand.u32 %v640, 2147483648
    %v653 = vor.u32 1.1754944e-38, %v652
    %v654 = vsel %vm651, %v653, %v649
    %v655 = vmul.f32 1.0, %v654
    %v656 = vadd.f32 %v634, %v610
    %v657 = vxor.u32 %v656, 2147483648
    %v658 = vmul.f32 %v657, 1.442695
    %v659 = vpow.pop %v658
    %v660 = vadd.f32 %v659, 1.0
    %v661 = vrcp.pop %v660
    %v662 = vmul.f32 %v660, %v661
    %v663 = vsub.f32 1.0, %v662
    %v664 = vmul.f32 %v661, %v663
    %v665 = vadd.f32 %v661, %v664
    %vm666 = vweird.f32 %v660
    %vm667 = vweird.f32 %v661
    %vm668 = vmor %vm666, %vm667
    %v669 = vsel %vm668, %v661, %v665
    %v670 = vand.u32 2147483647, %v660
    %vm671 = vcmp.eq.f32.partialorder %v670, 8.507059e+37
    %v672 = vand.u32 %v660, 2147483648
    %v673 = vor.u32 1.1754944e-38, %v672
    %v674 = vsel %vm671, %v673, %v669
    %v675 = vmul.f32 1.0, %v674
    %v676 = vmul.f32 %v655, %v630
    %v677 = vadd.f32 %v635, %v676
    %v678 = vtanh.pop %v677
    %v679 = vsub.f32 1.0, %v675
    %v680 = vmul.f32 %v679, %v678
    %v681 = vmul.f32 %v675, %v569
    %v682 = vadd.f32 %v680, %v681
    %s683 = scalar_lea.vmem [#allocation9], 32
    %684 = vst [vmem:[%s683] sm:$0xff] %v682
    %685 = vmatpush.msra.mxu0 %v110
    %686 = vmatpush.msra.mxu0 %v107
    %687 = vmatpush.msra.mxu0 %v104
    %688 = vmatpush.msra.mxu0 %v101
    %689 = vmatpush.msra.mxu0 %v98
    %690 = vmatpush.msra.mxu0 %v95
    %691 = vmatpush.msra.mxu0 %v92
    %692 = vmatpush.msra.mxu0 %v89
    %693 = vmatpush.msra.mxu0 %v86
    %694 = vmatpush.msra.mxu0 %v83
    %695 = vmatpush.msra.mxu0 %v80
    %696 = vmatpush.msra.mxu0 %v77
    %697 = vmatpush.msra.mxu0 %v74
    %698 = vmatpush.msra.mxu0 %v71
    %699 = vmatpush.msra.mxu0 %v68
    %700 = vmatpush.msra.mxu0 %v65
    %701 = vmatmul.f32.gmra.mxu0 %v682
    %v702 = vpop.f32.mrf.mxu0
    %v703 = vadd.f32 %v116, %v702
    %704 = vdwg.mxu0
    %705 = vmatpush.msra.mxu0 %v111
    %706 = vmatpush.msra.mxu0 %v108
    %707 = vmatpush.msra.mxu0 %v105
    %708 = vmatpush.msra.mxu0 %v102
    %709 = vmatpush.msra.mxu0 %v99
    %710 = vmatpush.msra.mxu0 %v96
    %711 = vmatpush.msra.mxu0 %v93
    %712 = vmatpush.msra.mxu0 %v90
    %713 = vmatpush.msra.mxu0 %v87
    %714 = vmatpush.msra.mxu0 %v84
    %715 = vmatpush.msra.mxu0 %v81
    %716 = vmatpush.msra.mxu0 %v78
    %717 = vmatpush.msra.mxu0 %v75
    %718 = vmatpush.msra.mxu0 %v72
    %719 = vmatpush.msra.mxu0 %v69
    %720 = vmatpush.msra.mxu0 %v66
    %721 = vmatmul.f32.gmra.mxu0 %v682
    %v722 = vpop.f32.mrf.mxu0
    %v723 = vadd.f32 %v117, %v722
    %724 = vdwg.mxu0
    %725 = vmatpush.msra.mxu0 %v112
    %726 = vmatpush.msra.mxu0 %v109
    %727 = vmatpush.msra.mxu0 %v106
    %728 = vmatpush.msra.mxu0 %v103
    %729 = vmatpush.msra.mxu0 %v100
    %730 = vmatpush.msra.mxu0 %v97
    %731 = vmatpush.msra.mxu0 %v94
    %732 = vmatpush.msra.mxu0 %v91
    %733 = vmatpush.msra.mxu0 %v88
    %734 = vmatpush.msra.mxu0 %v85
    %735 = vmatpush.msra.mxu0 %v82
    %736 = vmatpush.msra.mxu0 %v79
    %737 = vmatpush.msra.mxu0 %v76
    %738 = vmatpush.msra.mxu0 %v73
    %739 = vmatpush.msra.mxu0 %v70
    %740 = vmatpush.msra.mxu0 %v67
    %741 = vmatmul.f32.gmra.mxu0 %v682
    %v742 = vpop.f32.mrf.mxu0
    %v743 = vadd.f32 %v118, %v742
    %744 = vdwg.mxu0
    %s745 = scalar_lea.vmem [#allocation3], 120
    %v746 = vld [vmem:[%s745] sm:$0xff]
    %v747 = vld [vmem:[%s745 + $0x8] sm:$0xff]
    %v748 = vld [vmem:[%s745 + $0x10] sm:$0xff]
    %v749 = vadd.f32 %v746, %v703
    %v750 = vxor.u32 %v749, 2147483648
    %v751 = vmul.f32 %v750, 1.442695
    %v752 = vpow.pop %v751
    %v753 = vadd.f32 %v752, 1.0
    %v754 = vrcp.pop %v753
    %v755 = vmul.f32 %v753, %v754
    %v756 = vsub.f32 1.0, %v755
    %v757 = vmul.f32 %v754, %v756
    %v758 = vadd.f32 %v754, %v757
    %vm759 = vweird.f32 %v753
    %vm760 = vweird.f32 %v754
    %vm761 = vmor %vm759, %vm760
    %v762 = vsel %vm761, %v754, %v758
    %v763 = vand.u32 2147483647, %v753
    %vm764 = vcmp.eq.f32.partialorder %v763, 8.507059e+37
    %v765 = vand.u32 %v753, 2147483648
    %v766 = vor.u32 1.1754944e-38, %v765
    %v767 = vsel %vm764, %v766, %v762
    %v768 = vmul.f32 1.0, %v767
    %v769 = vadd.f32 %v747, %v723
    %v770 = vxor.u32 %v769, 2147483648
    %v771 = vmul.f32 %v770, 1.442695
    %v772 = vpow.pop %v771
    %v773 = vadd.f32 %v772, 1.0
    %v774 = vrcp.pop %v773
    %v775 = vmul.f32 %v773, %v774
    %v776 = vsub.f32 1.0, %v775
    %v777 = vmul.f32 %v774, %v776
    %v778 = vadd.f32 %v774, %v777
    %vm779 = vweird.f32 %v773
    %vm780 = vweird.f32 %v774
    %vm781 = vmor %vm779, %vm780
    %v782 = vsel %vm781, %v774, %v778
    %v783 = vand.u32 2147483647, %v773
    %vm784 = vcmp.eq.f32.partialorder %v783, 8.507059e+37
    %v785 = vand.u32 %v773, 2147483648
    %v786 = vor.u32 1.1754944e-38, %v785
    %v787 = vsel %vm784, %v786, %v782
    %v788 = vmul.f32 1.0, %v787
    %v789 = vmul.f32 %v768, %v743
    %v790 = vadd.f32 %v748, %v789
    %v791 = vtanh.pop %v790
    %v792 = vsub.f32 1.0, %v788
    %v793 = vmul.f32 %v792, %v791
    %v794 = vmul.f32 %v788, %v682
    %v795 = vadd.f32 %v793, %v794
    %s796 = scalar_lea.vmem [#allocation9], 40
    %797 = vst [vmem:[%s796] sm:$0xff] %v795
    %798 = vmatpush.msra.mxu0 %v110
    %799 = vmatpush.msra.mxu0 %v107
    %800 = vmatpush.msra.mxu0 %v104
    %801 = vmatpush.msra.mxu0 %v101
    %802 = vmatpush.msra.mxu0 %v98
    %803 = vmatpush.msra.mxu0 %v95
    %804 = vmatpush.msra.mxu0 %v92
    %805 = vmatpush.msra.mxu0 %v89
    %806 = vmatpush.msra.mxu0 %v86
    %807 = vmatpush.msra.mxu0 %v83
    %808 = vmatpush.msra.mxu0 %v80
    %809 = vmatpush.msra.mxu0 %v77
    %810 = vmatpush.msra.mxu0 %v74
    %811 = vmatpush.msra.mxu0 %v71
    %812 = vmatpush.msra.mxu0 %v68
    %813 = vmatpush.msra.mxu0 %v65
    %814 = vmatmul.f32.gmra.mxu0 %v795
    %v815 = vpop.f32.mrf.mxu0
    %v816 = vadd.f32 %v116, %v815
    %817 = vdwg.mxu0
    %818 = vmatpush.msra.mxu0 %v111
    %819 = vmatpush.msra.mxu0 %v108
    %820 = vmatpush.msra.mxu0 %v105
    %821 = vmatpush.msra.mxu0 %v102
    %822 = vmatpush.msra.mxu0 %v99
    %823 = vmatpush.msra.mxu0 %v96
    %824 = vmatpush.msra.mxu0 %v93
    %825 = vmatpush.msra.mxu0 %v90
    %826 = vmatpush.msra.mxu0 %v87
    %827 = vmatpush.msra.mxu0 %v84
    %828 = vmatpush.msra.mxu0 %v81
    %829 = vmatpush.msra.mxu0 %v78
    %830 = vmatpush.msra.mxu0 %v75
    %831 = vmatpush.msra.mxu0 %v72
    %832 = vmatpush.msra.mxu0 %v69
    %833 = vmatpush.msra.mxu0 %v66
    %834 = vmatmul.f32.gmra.mxu0 %v795
    %v835 = vpop.f32.mrf.mxu0
    %v836 = vadd.f32 %v117, %v835
    %837 = vdwg.mxu0
    %838 = vmatpush.msra.mxu0 %v112
    %839 = vmatpush.msra.mxu0 %v109
    %840 = vmatpush.msra.mxu0 %v106
    %841 = vmatpush.msra.mxu0 %v103
    %842 = vmatpush.msra.mxu0 %v100
    %843 = vmatpush.msra.mxu0 %v97
    %844 = vmatpush.msra.mxu0 %v94
    %845 = vmatpush.msra.mxu0 %v91
    %846 = vmatpush.msra.mxu0 %v88
    %847 = vmatpush.msra.mxu0 %v85
    %848 = vmatpush.msra.mxu0 %v82
    %849 = vmatpush.msra.mxu0 %v79
    %850 = vmatpush.msra.mxu0 %v76
    %851 = vmatpush.msra.mxu0 %v73
    %852 = vmatpush.msra.mxu0 %v70
    %853 = vmatpush.msra.mxu0 %v67
    %854 = vmatmul.f32.gmra.mxu0 %v795
    %v855 = vpop.f32.mrf.mxu0
    %v856 = vadd.f32 %v118, %v855
    %857 = vdwg.mxu0
    %s858 = scalar_lea.vmem [#allocation3], 144
    %v859 = vld [vmem:[%s858] sm:$0xff]
    %v860 = vld [vmem:[%s858 + $0x8] sm:$0xff]
    %v861 = vld [vmem:[%s858 + $0x10] sm:$0xff]
    %v862 = vadd.f32 %v859, %v816
    %v863 = vxor.u32 %v862, 2147483648
    %v864 = vmul.f32 %v863, 1.442695
    %v865 = vpow.pop %v864
    %v866 = vadd.f32 %v865, 1.0
    %v867 = vrcp.pop %v866
    %v868 = vmul.f32 %v866, %v867
    %v869 = vsub.f32 1.0, %v868
    %v870 = vmul.f32 %v867, %v869
    %v871 = vadd.f32 %v867, %v870
    %vm872 = vweird.f32 %v866
    %vm873 = vweird.f32 %v867
    %vm874 = vmor %vm872, %vm873
    %v875 = vsel %vm874, %v867, %v871
    %v876 = vand.u32 2147483647, %v866
    %vm877 = vcmp.eq.f32.partialorder %v876, 8.507059e+37
    %v878 = vand.u32 %v866, 2147483648
    %v879 = vor.u32 1.1754944e-38, %v878
    %v880 = vsel %vm877, %v879, %v875
    %v881 = vmul.f32 1.0, %v880
    %v882 = vadd.f32 %v860, %v836
    %v883 = vxor.u32 %v882, 2147483648
    %v884 = vmul.f32 %v883, 1.442695
    %v885 = vpow.pop %v884
    %v886 = vadd.f32 %v885, 1.0
    %v887 = vrcp.pop %v886
    %v888 = vmul.f32 %v886, %v887
    %v889 = vsub.f32 1.0, %v888
    %v890 = vmul.f32 %v887, %v889
    %v891 = vadd.f32 %v887, %v890
    %vm892 = vweird.f32 %v886
    %vm893 = vweird.f32 %v887
    %vm894 = vmor %vm892, %vm893
    %v895 = vsel %vm894, %v887, %v891
    %v896 = vand.u32 2147483647, %v886
    %vm897 = vcmp.eq.f32.partialorder %v896, 8.507059e+37
    %v898 = vand.u32 %v886, 2147483648
    %v899 = vor.u32 1.1754944e-38, %v898
    %v900 = vsel %vm897, %v899, %v895
    %v901 = vmul.f32 1.0, %v900
    %v902 = vmul.f32 %v881, %v856
    %v903 = vadd.f32 %v861, %v902
    %v904 = vtanh.pop %v903
    %v905 = vsub.f32 1.0, %v901
    %v906 = vmul.f32 %v905, %v904
    %v907 = vmul.f32 %v901, %v795
    %v908 = vadd.f32 %v906, %v907
    %s909 = scalar_lea.vmem [#allocation9], 48
    %910 = vst [vmem:[%s909] sm:$0xff] %v908
    %911 = vmatpush.msra.mxu0 %v110
    %912 = vmatpush.msra.mxu0 %v107
    %913 = vmatpush.msra.mxu0 %v104
    %914 = vmatpush.msra.mxu0 %v101
    %915 = vmatpush.msra.mxu0 %v98
    %916 = vmatpush.msra.mxu0 %v95
    %917 = vmatpush.msra.mxu0 %v92
    %918 = vmatpush.msra.mxu0 %v89
    %919 = vmatpush.msra.mxu0 %v86
    %920 = vmatpush.msra.mxu0 %v83
    %921 = vmatpush.msra.mxu0 %v80
    %922 = vmatpush.msra.mxu0 %v77
    %923 = vmatpush.msra.mxu0 %v74
    %924 = vmatpush.msra.mxu0 %v71
    %925 = vmatpush.msra.mxu0 %v68
    %926 = vmatpush.msra.mxu0 %v65
    %927 = vmatmul.f32.gmra.mxu0 %v908
    %v928 = vpop.f32.mrf.mxu0
    %v929 = vadd.f32 %v116, %v928
    %930 = vdwg.mxu0
    %931 = vmatpush.msra.mxu0 %v111
    %932 = vmatpush.msra.mxu0 %v108
    %933 = vmatpush.msra.mxu0 %v105
    %934 = vmatpush.msra.mxu0 %v102
    %935 = vmatpush.msra.mxu0 %v99
    %936 = vmatpush.msra.mxu0 %v96
    %937 = vmatpush.msra.mxu0 %v93
    %938 = vmatpush.msra.mxu0 %v90
    %939 = vmatpush.msra.mxu0 %v87
    %940 = vmatpush.msra.mxu0 %v84
    %941 = vmatpush.msra.mxu0 %v81
    %942 = vmatpush.msra.mxu0 %v78
    %943 = vmatpush.msra.mxu0 %v75
    %944 = vmatpush.msra.mxu0 %v72
    %945 = vmatpush.msra.mxu0 %v69
    %946 = vmatpush.msra.mxu0 %v66
    %947 = vmatmul.f32.gmra.mxu0 %v908
    %v948 = vpop.f32.mrf.mxu0
    %v949 = vadd.f32 %v117, %v948
    %950 = vdwg.mxu0
    %951 = vmatpush.msra.mxu0 %v112
    %952 = vmatpush.msra.mxu0 %v109
    %953 = vmatpush.msra.mxu0 %v106
    %954 = vmatpush.msra.mxu0 %v103
    %955 = vmatpush.msra.mxu0 %v100
    %956 = vmatpush.msra.mxu0 %v97
    %957 = vmatpush.msra.mxu0 %v94
    %958 = vmatpush.msra.mxu0 %v91
    %959 = vmatpush.msra.mxu0 %v88
    %960 = vmatpush.msra.mxu0 %v85
    %961 = vmatpush.msra.mxu0 %v82
    %962 = vmatpush.msra.mxu0 %v79
    %963 = vmatpush.msra.mxu0 %v76
    %964 = vmatpush.msra.mxu0 %v73
    %965 = vmatpush.msra.mxu0 %v70
    %966 = vmatpush.msra.mxu0 %v67
    %967 = vmatmul.f32.gmra.mxu0 %v908
    %v968 = vpop.f32.mrf.mxu0
    %v969 = vadd.f32 %v118, %v968
    %970 = vdwg.mxu0
    %s971 = scalar_lea.vmem [#allocation3], 168
    %v972 = vld [vmem:[%s971] sm:$0xff]
    %v973 = vld [vmem:[%s971 + $0x8] sm:$0xff]
    %v974 = vld [vmem:[%s971 + $0x10] sm:$0xff]
    %v975 = vadd.f32 %v972, %v929
    %v976 = vxor.u32 %v975, 2147483648
    %v977 = vmul.f32 %v976, 1.442695
    %v978 = vpow.pop %v977
    %v979 = vadd.f32 %v978, 1.0
    %v980 = vrcp.pop %v979
    %v981 = vmul.f32 %v979, %v980
    %v982 = vsub.f32 1.0, %v981
    %v983 = vmul.f32 %v980, %v982
    %v984 = vadd.f32 %v980, %v983
    %vm985 = vweird.f32 %v979
    %vm986 = vweird.f32 %v980
    %vm987 = vmor %vm985, %vm986
    %v988 = vsel %vm987, %v980, %v984
    %v989 = vand.u32 2147483647, %v979
    %vm990 = vcmp.eq.f32.partialorder %v989, 8.507059e+37
    %v991 = vand.u32 %v979, 2147483648
    %v992 = vor.u32 1.1754944e-38, %v991
    %v993 = vsel %vm990, %v992, %v988
    %v994 = vmul.f32 1.0, %v993
    %v995 = vadd.f32 %v973, %v949
    %v996 = vxor.u32 %v995, 2147483648
    %v997 = vmul.f32 %v996, 1.442695
    %v998 = vpow.pop %v997
    %v999 = vadd.f32 %v998, 1.0
    %v1000 = vrcp.pop %v999
    %v1001 = vmul.f32 %v999, %v1000
    %v1002 = vsub.f32 1.0, %v1001
    %v1003 = vmul.f32 %v1000, %v1002
    %v1004 = vadd.f32 %v1000, %v1003
    %vm1005 = vweird.f32 %v999
    %vm1006 = vweird.f32 %v1000
    %vm1007 = vmor %vm1005, %vm1006
    %v1008 = vsel %vm1007, %v1000, %v1004
    %v1009 = vand.u32 2147483647, %v999
    %vm1010 = vcmp.eq.f32.partialorder %v1009, 8.507059e+37
    %v1011 = vand.u32 %v999, 2147483648
    %v1012 = vor.u32 1.1754944e-38, %v1011
    %v1013 = vsel %vm1010, %v1012, %v1008
    %v1014 = vmul.f32 1.0, %v1013
    %v1015 = vmul.f32 %v994, %v969
    %v1016 = vadd.f32 %v974, %v1015
    %v1017 = vtanh.pop %v1016
    %v1018 = vsub.f32 1.0, %v1014
    %v1019 = vmul.f32 %v1018, %v1017
    %v1020 = vmul.f32 %v1014, %v908
    %v1021 = vadd.f32 %v1019, %v1020
    %s1022 = scalar_lea.vmem [#allocation9], 56
    %1023 = vst [vmem:[%s1022] sm:$0xff] %v1021
    %1024 = vst [vmem:[#allocation2] sm:$0xff] %v1021
    // Predicated region
    $region30: #{tpu_custom_call.1} parent=1 // pred_check
      _
    $region31: #{tpu_custom_call.1} parent=1 // pred_check_branch
      %1026 = sbr.rel (0) target = $region33
    $region32: #{tpu_custom_call.1} parent=1 // pred_region
      %1028 = vsyncadd [#allocation5], 0
      %s1029 = sshll.u32 [#allocation9], 4
      %s1030 = int_to_ptr.vmem [resolvable:$true] %s1029
      %s1031 = sshll.u32 %s3, 4
      %s1032 = int_to_ptr.hbm [resolvable:$true] %s1031
      %1037 = dma.vmem_to_hbm [thread:$0]  %s1030, 1024, %s1032, [#allocation5], 128, 128, 8
    $region33: #{tpu_custom_call.1} parent=1 // pred_fallthru
      _
    // Predicated region
    $region34: #{tpu_custom_call.1} parent=1 // pred_check
      _
    $region35: #{tpu_custom_call.1} parent=1 // pred_check_branch
      %1039 = sbr.rel (0) target = $region37
    $region36: #{tpu_custom_call.1} parent=1 // pred_region
      %1041 = dma.done [#allocation5], 1024
    $region37: #{tpu_custom_call.1} parent=1 // pred_fallthru
      _
    %1042 = vsyncpa [#allocation4], 1
    %1043 = vsyncpa [#allocation7], 1
    %1044 = vsyncpa [#allocation5], 1

</llo_original>
